<compile_context>
chip_gen: v7x
topology: tpu7x:2x2x1
jax: 0.10.0
libtpu: 0.0.40
codegen_flags: <defaults>
</compile_context>

<pallas_src>
import functools
import math

import jax
import jax.numpy as jnp
from jax import lax
from jax.experimental import pallas as pl
from jax.experimental.pallas import tpu as pltpu


# ---------------------------------------------------------------------------
# Fused Pallas kernel: [per step] forward + CE loss + backward + SGHMC update,
# with params/momenta VMEM-resident across the whole step grid.
# ---------------------------------------------------------------------------

def _fused_kernel(*refs, lr_body, lr_head, prior_sig, momentum_decay,
                  noise_body, noise_head, should_sample, n_valid):
    if should_sample:
        (x_ref, y_ref, w1_in, b1_in, w2_in, b2_in, v1_in, vb1_in, v2_in, vb2_in,
         n1_ref, nb1_ref, n2_ref, nb2_ref,
         loss_ref, logits_ref,
         w1_ref, b1_ref, w2_ref, b2_ref,
         v1_ref, vb1_ref, v2_ref, vb2_ref) = refs
    else:
        (x_ref, y_ref, w1_in, b1_in, w2_in, b2_in, v1_in, vb1_in, v2_in, vb2_in,
         loss_ref, logits_ref,
         w1_ref, b1_ref, w2_ref, b2_ref,
         v1_ref, vb1_ref, v2_ref, vb2_ref) = refs
        n1_ref = nb1_ref = n2_ref = nb2_ref = None

    f32 = jnp.float32
    bf16 = jnp.bfloat16
    step = pl.program_id(0)

    # ---- step 0: load params & momenta from HBM into the resident output tiles ----
    @pl.when(step == 0)
    def _():
        w1_ref[...] = w1_in[...]
        b1_ref[...] = b1_in[...]
        w2_ref[...] = w2_in[...]
        b2_ref[...] = b2_in[...]
        v1_ref[...] = v1_in[...]
        vb1_ref[...] = vb1_in[...]
        v2_ref[...] = v2_in[...]
        vb2_ref[...] = vb2_in[...]

    x = x_ref[0]                          # (Bp, D)  zero-padded batch for this step
    w1 = w1_ref[...]                      # (H, D)   torch layout (out, in)
    b1 = b1_ref[...]                      # (1, H)
    w2 = w2_ref[...]                      # (C, H)
    b2 = b2_ref[...]                      # (1, C)

    # ---------------- forward (bf16 MXU operands, f32 accumulation) ----------------
    xb = x.astype(bf16)
    h_pre = lax.dot_general(xb, w1.astype(bf16), (((1,), (1,)), ((), ())),
                            preferred_element_type=f32) + b1          # (Bp, H)
    h = jnp.maximum(h_pre, 0.0)
    logits = lax.dot_general(h.astype(bf16), w2.astype(bf16),
                             (((1,), (1,)), ((), ())),
                             preferred_element_type=f32) + b2         # (Bp, C)
    logits_ref[0] = logits

    # -------- mean cross-entropy over the n_valid real rows + dL/dlogits --------
    Bp, C = logits.shape
    row = lax.broadcasted_iota(jnp.int32, (Bp, 1), 0)
    row_mask = (row < n_valid).astype(f32)                            # (Bp, 1)
    cls = lax.broadcasted_iota(jnp.int32, (Bp, C), 1)
    onehot = (cls == y_ref[0]).astype(f32)                            # (Bp, C)

    m = jnp.max(logits, axis=-1, keepdims=True)
    ex = jnp.exp(logits - m)
    denom = jnp.sum(ex, axis=-1, keepdims=True)
    p_soft = ex / denom
    logp = logits - m - jnp.log(denom)
    nll = -jnp.sum(onehot * logp, axis=-1, keepdims=True) * row_mask  # (Bp, 1)

    inv_n = 1.0 / float(n_valid)
    loss_ref[...] = jnp.sum(nll, axis=0, keepdims=True) * inv_n       # (1, 1)

    dl = (p_soft - onehot) * (row_mask * inv_n)                       # (Bp, C)

    # ---------------- backward (all grads, bf16 MXU operands) ----------------
    dlb = dl.astype(bf16)
    dw2 = lax.dot_general(dlb, h.astype(bf16), (((0,), (0,)), ((), ())),
                          preferred_element_type=f32)                 # (C, H)
    db2 = jnp.sum(dl, axis=0, keepdims=True)                          # (1, C)
    dh = lax.dot_general(dlb, w2.astype(bf16), (((1,), (0,)), ((), ())),
                         preferred_element_type=f32)                  # (Bp, H)
    dh = dh * (h > 0.0).astype(f32)
    dw1 = lax.dot_general(dh.astype(bf16), xb, (((0,), (0,)), ((), ())),
                          preferred_element_type=f32)                 # (H, D)
    db1 = jnp.sum(dh, axis=0, keepdims=True)                          # (1, H)

    # ---------------- SGHMC updates (f32 elementwise; reference formulas) ----------
    def _update(p_ref, v_ref, g, lr, nscale, n_ref):
        # NOTE: reference applies grad + prior_sig * p for BOTH bias branches
        # ('informative' / 'uninformative' collapse to the same formula) - reproduced.
        p = p_ref[...]
        grad_u = g + prior_sig * p
        v_new = v_ref[...] * (1.0 - momentum_decay) - lr * grad_u
        if should_sample:
            v_new = v_new + nscale * n_ref[0]
        v_ref[...] = v_new
        p_ref[...] = p + v_new            # p.data.add_(v)

    _update(w1_ref, v1_ref, dw1, lr_body, noise_body, n1_ref)
    _update(b1_ref, vb1_ref, db1, lr_body, noise_body, nb1_ref)
    _update(w2_ref, v2_ref, dw2, lr_head, noise_head, n2_ref)
    _update(b2_ref, vb2_ref, db2, lr_head, noise_head, nb2_ref)


# ---------------------------------------------------------------------------
# jitted multi-step runner builder (cached per static config)
# ---------------------------------------------------------------------------

@functools.lru_cache(maxsize=None)
def _build_run_fn(num_steps, Bp, B, D, H, C, lr_body, lr_head, prior_sig,
                  momentum_decay, noise_body, noise_head, should_sample):
    kernel = functools.partial(
        _fused_kernel,
        lr_body=float(lr_body), lr_head=float(lr_head),
        prior_sig=float(prior_sig), momentum_decay=float(momentum_decay),
        noise_body=float(noise_body), noise_head=float(noise_head),
        should_sample=bool(should_sample), n_valid=int(B))

    # -------- input specs: per-step staged x/y(/noise); params fetched once --------
    in_specs = [
        pl.BlockSpec((1, Bp, D), lambda s: (s, 0, 0)),   # x (staged per step)
        pl.BlockSpec((1, Bp, 1), lambda s: (s, 0, 0)),   # y (staged per step)
        pl.BlockSpec((H, D), lambda s: (0, 0)),          # w1
        pl.BlockSpec((1, H), lambda s: (0, 0)),          # b1
        pl.BlockSpec((C, H), lambda s: (0, 0)),          # w2
        pl.BlockSpec((1, C), lambda s: (0, 0)),          # b2
        pl.BlockSpec((H, D), lambda s: (0, 0)),          # v1
        pl.BlockSpec((1, H), lambda s: (0, 0)),          # vb1
        pl.BlockSpec((C, H), lambda s: (0, 0)),          # v2
        pl.BlockSpec((1, C), lambda s: (0, 0)),          # vb2
    ]
    if should_sample:
        in_specs += [
            pl.BlockSpec((1, H, D), lambda s: (s, 0, 0)),   # noise w1
            pl.BlockSpec((1, 1, H), lambda s: (s, 0, 0)),   # noise b1
            pl.BlockSpec((1, C, H), lambda s: (s, 0, 0)),   # noise w2
            pl.BlockSpec((1, 1, C), lambda s: (s, 0, 0)),   # noise b2
        ]

    out_shape = (
        jax.ShapeDtypeStruct((num_steps, 1), jnp.float32),      # per-step mean CE
        jax.ShapeDtypeStruct((num_steps, Bp, C), jnp.float32),  # per-step logits
        jax.ShapeDtypeStruct((H, D), jnp.float32),              # w1'
        jax.ShapeDtypeStruct((1, H), jnp.float32),              # b1'
        jax.ShapeDtypeStruct((C, H), jnp.float32),              # w2'
        jax.ShapeDtypeStruct((1, C), jnp.float32),              # b2'
        jax.ShapeDtypeStruct((H, D), jnp.float32),              # v1'
        jax.ShapeDtypeStruct((1, H), jnp.float32),              # vb1'
        jax.ShapeDtypeStruct((C, H), jnp.float32),              # v2'
        jax.ShapeDtypeStruct((1, C), jnp.float32),              # vb2'
    )
    # Param/momentum outputs keep the same block index on every step: they stay
    # VMEM-resident across the step grid and are written back to HBM once.
    out_specs = (
        pl.BlockSpec((1, 1), lambda s: (s, 0)),
        pl.BlockSpec((1, Bp, C), lambda s: (s, 0, 0)),
        pl.BlockSpec((H, D), lambda s: (0, 0)),
        pl.BlockSpec((1, H), lambda s: (0, 0)),
        pl.BlockSpec((C, H), lambda s: (0, 0)),
        pl.BlockSpec((1, C), lambda s: (0, 0)),
        pl.BlockSpec((H, D), lambda s: (0, 0)),
        pl.BlockSpec((1, H), lambda s: (0, 0)),
        pl.BlockSpec((C, H), lambda s: (0, 0)),
        pl.BlockSpec((1, C), lambda s: (0, 0)),
    )

    fused = pl.pallas_call(
        kernel,
        grid=(num_steps,),
        in_specs=in_specs,
        out_specs=out_specs,
        out_shape=out_shape,
        # params / momenta updated in place (HBM buffers aliased to outputs)
        input_output_aliases={2: 2, 3: 3, 4: 4, 5: 5, 6: 6, 7: 7, 8: 8, 9: 9},
        compiler_params=pltpu.CompilerParams(dimension_semantics=("arbitrary",)),
    )

    def run(xs, ys, w1, b1, w2, b2, v1, vb1, v2, vb2, noise_key):
        S = xs.shape[0]
        # layout: NCHW flattened row-major, exactly like torch .view(B, -1)
        x_flat = xs.reshape(S, xs.shape[1], -1).astype(jnp.float32)
        x_pad = jnp.zeros((S, Bp, D), jnp.float32).at[:, :B].set(x_flat)
        y_pad = jnp.zeros((S, Bp, 1), jnp.int32).at[:, :B, 0].set(ys.astype(jnp.int32))
        args = [x_pad, y_pad, w1, b1, w2, b2, v1, vb1, v2, vb2]
        if should_sample:
            k1, k2, k3, k4 = jax.random.split(noise_key, 4)
            args += [jax.random.normal(k1, (S, H, D), jnp.float32),
                     jax.random.normal(k2, (S, 1, H), jnp.float32),
                     jax.random.normal(k3, (S, C, H), jnp.float32),
                     jax.random.normal(k4, (S, 1, C), jnp.float32)]
        outs = fused(*args)
        loss = outs[0][:, 0]          # (S,)
        logits = outs[1][:, :B]       # (S, B, C)
        return (loss, logits) + tuple(outs[2:])

    return jax.jit(run)


# ---------------------------------------------------------------------------
# SGHMC "Model" (JAX/Pallas re-implementation of csghmc_fs.Model)
# ---------------------------------------------------------------------------

class SGHMCModel:
    readout_name = "readout"

    def __init__(self, ND, runner=None, prior_sig=1.0, bias="informative",
                 momentum_decay=0.05):
        self.ND = ND
        self.prior_sig = prior_sig
        self.bias = bias
        self.momentum_decay = momentum_decay
        self.runner = runner
        self.momentum_buffer = None     # lazily initialized, like the torch version

    @staticmethod
    def _split_lrs(lrs):
        if len(lrs) == 1:
            return float(lrs[0]), float(lrs[0])
        return float(lrs[0]), float(lrs[1])

    def run_steps(self, xs, ys, params, net0_params, noise_key, lrs,
                  Ninflate=1.0, nd=1.0, should_sample=False):
        """Run S chained SGHMC steps (xs: (S,B,...), ys: (S,B)) in ONE pallas_call.

        Returns (per-step losses (S,), per-step logits (S,B,C)) and mutates
        params / momentum buffer in place (HBM-aliased)."""
        del net0_params   # net0 never enters the reference math
        N = self.ND * Ninflate
        lr_body, lr_head = self._split_lrs(lrs)

        if self.momentum_buffer is None:
            self.momentum_buffer = {k: jnp.zeros_like(v) for k, v in params.items()}

        w1, b1 = params["body.weight"], params["body.bias"]
        w2, b2 = params["readout.weight"], params["readout.bias"]
        v1, vb1 = self.momentum_buffer["body.weight"], self.momentum_buffer["body.bias"]
        v2, vb2 = (self.momentum_buffer["readout.weight"],
                   self.momentum_buffer["readout.bias"])

        S, B = xs.shape[0], xs.shape[1]
        H, D = w1.shape           # torch layout (out_features, in_features)
        C = w2.shape[0]
        Bp = max(8, ((B + 7) // 8) * 8)   # pad batch to f32 sublane height

        # reference: noise_scale = nd * sqrt(2*alpha*lr) / N
        noise_body = nd * math.sqrt(2.0 * self.momentum_decay * lr_body) / N
        noise_head = nd * math.sqrt(2.0 * self.momentum_decay * lr_head) / N

        run_fn = _build_run_fn(S, Bp, B, D, H, C,
                               lr_body, lr_head,
                               float(self.prior_sig), float(self.momentum_decay),
                               float(noise_body), float(noise_head),
                               bool(should_sample))

        (loss, logits, w1n, b1n, w2n, b2n,
         v1n, vb1n, v2n, vb2n) = run_fn(xs, ys, w1, b1, w2, b2,
                                        v1, vb1, v2, vb2, noise_key)

        params["body.weight"], params["body.bias"] = w1n, b1n
        params["readout.weight"], params["readout.bias"] = w2n, b2n
        self.momentum_buffer["body.weight"] = v1n
        self.momentum_buffer["body.bias"] = vb1n
        self.momentum_buffer["readout.weight"] = v2n
        self.momentum_buffer["readout.bias"] = vb2n

        # losses are device values: no host sync inside the step.
        return loss, logits

    def forward(self, x, y, params, net0_params, noise_key, lrs,
                Ninflate=1.0, nd=1.0, should_sample=False):
        """Single SGHMC step, same semantics as the torch forward."""
        loss, logits = self.run_steps(x[None], y[None], params, net0_params,
                                      noise_key, lrs, Ninflate=Ninflate, nd=nd,
                                      should_sample=should_sample)
        return loss[0], logits[0]


# ---------------------------------------------------------------------------
# Demo
# ---------------------------------------------------------------------------

if __name__ == "__main__":
    key = jax.random.PRNGKey(0)
    kx, ky, kw1, kb1, kw2, kb2, kn1, kn2, kn3 = jax.random.split(key, 9)

    B, Cin, Hs, Ws = 2, 4, 16, 16          # input: NCHW, like the torch module
    D = Cin * Hs * Ws                      # 1024 flattened features
    Hh = 32                                # hidden width
    NC = 10                                # number of classes

    x = jax.random.normal(kx, (B, Cin, Hs, Ws), jnp.float32)
    y = jax.random.randint(ky, (B,), 0, NC, dtype=jnp.int32)

    # synthetic "net" parameters in PyTorch nn.Linear layout (out_features, in_features)
    params = {
        "body.weight": 0.05 * jax.random.normal(kw1, (Hh, D), jnp.float32),
        "body.bias": 0.05 * jax.random.normal(kb1, (1, Hh), jnp.float32),
        "readout.weight": 0.05 * jax.random.normal(kw2, (NC, Hh), jnp.float32),
        "readout.bias": 0.05 * jax.random.normal(kb2, (1, NC), jnp.float32),
    }
    net0_params = {k: jnp.zeros_like(v) for k, v in params.items()}

    model = SGHMCModel(ND=1000, prior_sig=1.0, bias="informative",
                       momentum_decay=0.05)

    # one "exploration" step (no noise) and one "sampling" step (with noise)
    loss1, out1 = model.forward(x, y, params, net0_params, kn1,
                                lrs=[1e-4, 1e-3], Ninflate=1.0, nd=1.0,
                                should_sample=False)
    loss2, out2 = model.forward(x, y, params, net0_params, kn2,
                                lrs=[1e-4, 1e-3], Ninflate=1.0, nd=1.0,
                                should_sample=True)

    # fused multi-step trajectory: 4 chained SGHMC steps in ONE kernel launch,
    # params/momenta VMEM-resident for the whole trajectory.
    S = 4
    ksx, ksy, ksn = jax.random.split(kn3, 3)
    xs = jax.random.normal(ksx, (S, B, Cin, Hs, Ws), jnp.float32)
    ys = jax.random.randint(ksy, (S, B), 0, NC, dtype=jnp.int32)
    losses, logit_traj = model.run_steps(xs, ys, params, net0_params, ksn,
                                         lrs=[1e-4, 1e-3], should_sample=True)

    jax.block_until_ready(logit_traj)
    jax.block_until_ready(params["body.weight"])
    assert out1.shape == (B, NC) and out2.shape == (B, NC)
    assert logit_traj.shape == (S, B, NC) and losses.shape == (S,)
    assert math.isfinite(float(loss1)) and math.isfinite(float(loss2))
    assert bool(jnp.all(jnp.isfinite(losses)))
    print("KERNEL_OK")
</pallas_src>

<mosaic_0001>
module attributes {stable_mosaic.version = 11 : i64} {
  func.func @_fused_kernel(%arg0: i32, %arg1: memref<1x8x1024xf32, #tpu.memory_space<vmem>>, %arg2: memref<1x8x1xi32, #tpu.memory_space<vmem>>, %arg3: memref<32x1024xf32, #tpu.memory_space<vmem>>, %arg4: memref<1x32xf32, #tpu.memory_space<vmem>>, %arg5: memref<10x32xf32, #tpu.memory_space<vmem>>, %arg6: memref<1x10xf32, #tpu.memory_space<vmem>>, %arg7: memref<32x1024xf32, #tpu.memory_space<vmem>>, %arg8: memref<1x32xf32, #tpu.memory_space<vmem>>, %arg9: memref<10x32xf32, #tpu.memory_space<vmem>>, %arg10: memref<1x10xf32, #tpu.memory_space<vmem>>, %arg11: memref<1x1xf32, #tpu.memory_space<vmem>>, %arg12: memref<1x8x10xf32, #tpu.memory_space<vmem>>, %arg13: memref<32x1024xf32, #tpu.memory_space<vmem>>, %arg14: memref<1x32xf32, #tpu.memory_space<vmem>>, %arg15: memref<10x32xf32, #tpu.memory_space<vmem>>, %arg16: memref<1x10xf32, #tpu.memory_space<vmem>>, %arg17: memref<32x1024xf32, #tpu.memory_space<vmem>>, %arg18: memref<1x32xf32, #tpu.memory_space<vmem>>, %arg19: memref<10x32xf32, #tpu.memory_space<vmem>>, %arg20: memref<1x10xf32, #tpu.memory_space<vmem>>) attributes {dimension_semantics = [#tpu.dimension_semantics<arbitrary>], iteration_bounds = array<i64: 1>, scalar_prefetch = 0 : i64, scratch_operands = 0 : i64, tpu.core_type = #tpu.core_type<tc>, window_params = [{transform_indices = @transform_0, window_bounds = array<i64: 1, 8, 1024>}, {transform_indices = @transform_1, window_bounds = array<i64: 1, 8, 1>}, {pipeline_mode = #tpu.pipeline_mode<synchronous>, transform_indices = @transform_2, window_bounds = array<i64: 32, 1024>}, {pipeline_mode = #tpu.pipeline_mode<synchronous>, transform_indices = @transform_3, window_bounds = array<i64: 1, 32>}, {pipeline_mode = #tpu.pipeline_mode<synchronous>, transform_indices = @transform_4, window_bounds = array<i64: 10, 32>}, {pipeline_mode = #tpu.pipeline_mode<synchronous>, transform_indices = @transform_5, window_bounds = array<i64: 1, 10>}, {pipeline_mode = #tpu.pipeline_mode<synchronous>, transform_indices = @transform_6, window_bounds = array<i64: 32, 1024>}, {pipeline_mode = #tpu.pipeline_mode<synchronous>, transform_indices = @transform_7, window_bounds = array<i64: 1, 32>}, {pipeline_mode = #tpu.pipeline_mode<synchronous>, transform_indices = @transform_8, window_bounds = array<i64: 10, 32>}, {pipeline_mode = #tpu.pipeline_mode<synchronous>, transform_indices = @transform_9, window_bounds = array<i64: 1, 10>}, {transform_indices = @transform_10, window_bounds = array<i64: 1, 1>}, {transform_indices = @transform_11, window_bounds = array<i64: 1, 8, 10>}, {pipeline_mode = #tpu.pipeline_mode<synchronous>, transform_indices = @transform_12, window_bounds = array<i64: 32, 1024>}, {pipeline_mode = #tpu.pipeline_mode<synchronous>, transform_indices = @transform_13, window_bounds = array<i64: 1, 32>}, {pipeline_mode = #tpu.pipeline_mode<synchronous>, transform_indices = @transform_14, window_bounds = array<i64: 10, 32>}, {pipeline_mode = #tpu.pipeline_mode<synchronous>, transform_indices = @transform_15, window_bounds = array<i64: 1, 10>}, {pipeline_mode = #tpu.pipeline_mode<synchronous>, transform_indices = @transform_16, window_bounds = array<i64: 32, 1024>}, {pipeline_mode = #tpu.pipeline_mode<synchronous>, transform_indices = @transform_17, window_bounds = array<i64: 1, 32>}, {pipeline_mode = #tpu.pipeline_mode<synchronous>, transform_indices = @transform_18, window_bounds = array<i64: 10, 32>}, {pipeline_mode = #tpu.pipeline_mode<synchronous>, transform_indices = @transform_19, window_bounds = array<i64: 1, 10>}]} {
    %c0_i32 = arith.constant 0 : i32
    %0 = arith.cmpi eq, %arg0, %c0_i32 : i32
    %1 = arith.extui %0 : i1 to i32
    %c0_i32_0 = arith.constant 0 : i32
    %2 = arith.cmpi ne, %1, %c0_i32_0 : i32
    scf.if %2 {
      %c0_78 = arith.constant 0 : index
      %c0_79 = arith.constant 0 : index
      %134 = vector.load %arg3[%c0_78, %c0_79] : memref<32x1024xf32, #tpu.memory_space<vmem>>, vector<32x1024xf32>
      %c0_80 = arith.constant 0 : index
      %c0_81 = arith.constant 0 : index
      %135 = vector.load %arg13[%c0_80, %c0_81] : memref<32x1024xf32, #tpu.memory_space<vmem>>, vector<32x1024xf32>
      tpu.vector_store %arg13[%c0_80, %c0_81], %134 {strides = array<i32>} : memref<32x1024xf32, #tpu.memory_space<vmem>>, vector<32x1024xf32>,
      %c0_82 = arith.constant 0 : index
      %c0_83 = arith.constant 0 : index
      %136 = vector.load %arg4[%c0_82, %c0_83] : memref<1x32xf32, #tpu.memory_space<vmem>>, vector<1x32xf32>
      %c0_84 = arith.constant 0 : index
      %c0_85 = arith.constant 0 : index
      %137 = vector.load %arg14[%c0_84, %c0_85] : memref<1x32xf32, #tpu.memory_space<vmem>>, vector<1x32xf32>
      tpu.vector_store %arg14[%c0_84, %c0_85], %136 {strides = array<i32>} : memref<1x32xf32, #tpu.memory_space<vmem>>, vector<1x32xf32>,
      %c0_86 = arith.constant 0 : index
      %c0_87 = arith.constant 0 : index
      %138 = vector.load %arg5[%c0_86, %c0_87] : memref<10x32xf32, #tpu.memory_space<vmem>>, vector<10x32xf32>
      %c0_88 = arith.constant 0 : index
      %c0_89 = arith.constant 0 : index
      %139 = vector.load %arg15[%c0_88, %c0_89] : memref<10x32xf32, #tpu.memory_space<vmem>>, vector<10x32xf32>
      tpu.vector_store %arg15[%c0_88, %c0_89], %138 {strides = array<i32>} : memref<10x32xf32, #tpu.memory_space<vmem>>, vector<10x32xf32>,
      %c0_90 = arith.constant 0 : index
      %c0_91 = arith.constant 0 : index
      %140 = vector.load %arg6[%c0_90, %c0_91] : memref<1x10xf32, #tpu.memory_space<vmem>>, vector<1x10xf32>
      %c0_92 = arith.constant 0 : index
      %c0_93 = arith.constant 0 : index
      %141 = vector.load %arg16[%c0_92, %c0_93] : memref<1x10xf32, #tpu.memory_space<vmem>>, vector<1x10xf32>
      tpu.vector_store %arg16[%c0_92, %c0_93], %140 {strides = array<i32>} : memref<1x10xf32, #tpu.memory_space<vmem>>, vector<1x10xf32>,
      %c0_94 = arith.constant 0 : index
      %c0_95 = arith.constant 0 : index
      %142 = vector.load %arg7[%c0_94, %c0_95] : memref<32x1024xf32, #tpu.memory_space<vmem>>, vector<32x1024xf32>
      %c0_96 = arith.constant 0 : index
      %c0_97 = arith.constant 0 : index
      %143 = vector.load %arg17[%c0_96, %c0_97] : memref<32x1024xf32, #tpu.memory_space<vmem>>, vector<32x1024xf32>
      tpu.vector_store %arg17[%c0_96, %c0_97], %142 {strides = array<i32>} : memref<32x1024xf32, #tpu.memory_space<vmem>>, vector<32x1024xf32>,
      %c0_98 = arith.constant 0 : index
      %c0_99 = arith.constant 0 : index
      %144 = vector.load %arg8[%c0_98, %c0_99] : memref<1x32xf32, #tpu.memory_space<vmem>>, vector<1x32xf32>
      %c0_100 = arith.constant 0 : index
      %c0_101 = arith.constant 0 : index
      %145 = vector.load %arg18[%c0_100, %c0_101] : memref<1x32xf32, #tpu.memory_space<vmem>>, vector<1x32xf32>
      tpu.vector_store %arg18[%c0_100, %c0_101], %144 {strides = array<i32>} : memref<1x32xf32, #tpu.memory_space<vmem>>, vector<1x32xf32>,
      %c0_102 = arith.constant 0 : index
      %c0_103 = arith.constant 0 : index
      %146 = vector.load %arg9[%c0_102, %c0_103] : memref<10x32xf32, #tpu.memory_space<vmem>>, vector<10x32xf32>
      %c0_104 = arith.constant 0 : index
      %c0_105 = arith.constant 0 : index
      %147 = vector.load %arg19[%c0_104, %c0_105] : memref<10x32xf32, #tpu.memory_space<vmem>>, vector<10x32xf32>
      tpu.vector_store %arg19[%c0_104, %c0_105], %146 {strides = array<i32>} : memref<10x32xf32, #tpu.memory_space<vmem>>, vector<10x32xf32>,
      %c0_106 = arith.constant 0 : index
      %c0_107 = arith.constant 0 : index
      %148 = vector.load %arg10[%c0_106, %c0_107] : memref<1x10xf32, #tpu.memory_space<vmem>>, vector<1x10xf32>
      %c0_108 = arith.constant 0 : index
      %c0_109 = arith.constant 0 : index
      %149 = vector.load %arg20[%c0_108, %c0_109] : memref<1x10xf32, #tpu.memory_space<vmem>>, vector<1x10xf32>
      tpu.vector_store %arg20[%c0_108, %c0_109], %148 {strides = array<i32>} : memref<1x10xf32, #tpu.memory_space<vmem>>, vector<1x10xf32>,
    } else {
    }
    %c0 = arith.constant 0 : index
    %c0_1 = arith.constant 0 : index
    %c0_2 = arith.constant 0 : index
    %3 = vector.load %arg1[%c0, %c0_1, %c0_2] : memref<1x8x1024xf32, #tpu.memory_space<vmem>>, vector<1x8x1024xf32>
    %4 = vector.shape_cast %3 : vector<1x8x1024xf32> to vector<8x1024xf32>
    %c0_3 = arith.constant 0 : index
    %c0_4 = arith.constant 0 : index
    %5 = vector.load %arg13[%c0_3, %c0_4] : memref<32x1024xf32, #tpu.memory_space<vmem>>, vector<32x1024xf32>
    %c0_5 = arith.constant 0 : index
    %c0_6 = arith.constant 0 : index
    %6 = vector.load %arg14[%c0_5, %c0_6] : memref<1x32xf32, #tpu.memory_space<vmem>>, vector<1x32xf32>
    %c0_7 = arith.constant 0 : index
    %c0_8 = arith.constant 0 : index
    %7 = vector.load %arg15[%c0_7, %c0_8] : memref<10x32xf32, #tpu.memory_space<vmem>>, vector<10x32xf32>
    %c0_9 = arith.constant 0 : index
    %c0_10 = arith.constant 0 : index
    %8 = vector.load %arg16[%c0_9, %c0_10] : memref<1x10xf32, #tpu.memory_space<vmem>>, vector<1x10xf32>
    %9 = arith.truncf %4 : vector<8x1024xf32> to vector<8x1024xbf16>
    %10 = arith.truncf %5 : vector<32x1024xf32> to vector<32x1024xbf16>
    %cst = arith.constant dense<0.000000e+00> : vector<8x32xf32>
    %11 = tpu.matmul %9, %10, %cst {dimension_numbers = #tpu.dot_dimension_numbers<[1], [1], [0], [0], [0, 0, 1, 0], [], []>} : vector<8x1024xbf16>, vector<32x1024xbf16>, vector<8x32xf32> -> vector<8x32xf32>
    %12 = vector.broadcast %6 : vector<1x32xf32> to vector<8x32xf32>
    %13 = arith.addf %11, %12 : vector<8x32xf32>
    %cst_11 = arith.constant 0.000000e+00 : f32
    %14 = vector.broadcast %cst_11 : f32 to vector<8x32xf32>
    %15 = arith.maximumf %13, %14 : vector<8x32xf32>
    %16 = arith.truncf %15 : vector<8x32xf32> to vector<8x32xbf16>
    %17 = arith.truncf %7 : vector<10x32xf32> to vector<10x32xbf16>
    %cst_12 = arith.constant dense<0.000000e+00> : vector<8x10xf32>
    %18 = tpu.matmul %16, %17, %cst_12 {dimension_numbers = #tpu.dot_dimension_numbers<[1], [1], [0], [0], [0, 0, 1, 0], [], []>} : vector<8x32xbf16>, vector<10x32xbf16>, vector<8x10xf32> -> vector<8x10xf32>
    %19 = vector.broadcast %8 : vector<1x10xf32> to vector<8x10xf32>
    %20 = arith.addf %18, %19 : vector<8x10xf32>
    %c0_13 = arith.constant 0 : index
    %c0_14 = arith.constant 0 : index
    %c0_15 = arith.constant 0 : index
    %21 = vector.load %arg12[%c0_13, %c0_14, %c0_15] : memref<1x8x10xf32, #tpu.memory_space<vmem>>, vector<1x8x10xf32>
    %22 = vector.shape_cast %21 : vector<1x8x10xf32> to vector<8x10xf32>
    %23 = vector.shape_cast %20 : vector<8x10xf32> to vector<1x8x10xf32>
    tpu.vector_store %arg12[%c0_13, %c0_14, %c0_15], %23 {strides = array<i32>} : memref<1x8x10xf32, #tpu.memory_space<vmem>>, vector<1x8x10xf32>,
    %24 = tpu.iota {dimensions = array<i32: 0>} : vector<8x1xi32>
    %c2_i32 = arith.constant 2 : i32
    %25 = vector.broadcast %c2_i32 : i32 to vector<8x1xi32>
    %26 = arith.cmpi slt, %24, %25 : vector<8x1xi32>
    %27 = arith.extui %26 : vector<8x1xi1> to vector<8x1xi32>
    %28 = arith.sitofp %27 : vector<8x1xi32> to vector<8x1xf32>
    %29 = tpu.iota {dimensions = array<i32: 1>} : vector<8x10xi32>
    %c0_16 = arith.constant 0 : index
    %c0_17 = arith.constant 0 : index
    %c0_18 = arith.constant 0 : index
    %30 = vector.load %arg2[%c0_16, %c0_17, %c0_18] : memref<1x8x1xi32, #tpu.memory_space<vmem>>, vector<1x8x1xi32>
    %31 = vector.shape_cast %30 : vector<1x8x1xi32> to vector<8x1xi32>
    %32 = vector.broadcast %31 : vector<8x1xi32> to vector<8x10xi32>
    %33 = arith.cmpi eq, %29, %32 : vector<8x10xi32>
    %34 = arith.extui %33 : vector<8x10xi1> to vector<8x10xi32>
    %35 = arith.sitofp %34 : vector<8x10xi32> to vector<8x10xf32>
    %cst_19 = arith.constant dense<0xFF800000> : vector<8xf32>
    %36 = vector.multi_reduction <maximumf>, %20, %cst_19 [1] : vector<8x10xf32> to vector<8xf32>
    %37 = vector.shape_cast %36 : vector<8xf32> to vector<8x1xf32>
    %38 = vector.broadcast %37 : vector<8x1xf32> to vector<8x10xf32>
    %39 = arith.subf %20, %38 : vector<8x10xf32>
    %40 = math.exp %39 : vector<8x10xf32>
    %cst_20 = arith.constant dense<0.000000e+00> : vector<8xf32>
    %41 = vector.multi_reduction <add>, %40, %cst_20 [1] : vector<8x10xf32> to vector<8xf32>
    %42 = vector.shape_cast %41 : vector<8xf32> to vector<8x1xf32>
    %43 = vector.broadcast %42 : vector<8x1xf32> to vector<8x10xf32>
    %44 = arith.divf %40, %43 : vector<8x10xf32>
    %45 = vector.broadcast %37 : vector<8x1xf32> to vector<8x10xf32>
    %46 = arith.subf %20, %45 : vector<8x10xf32>
    %47 = math.log %42 : vector<8x1xf32>
    %48 = vector.broadcast %47 : vector<8x1xf32> to vector<8x10xf32>
    %49 = arith.subf %46, %48 : vector<8x10xf32>
    %50 = arith.mulf %35, %49 : vector<8x10xf32>
    %cst_21 = arith.constant dense<0.000000e+00> : vector<8xf32>
    %51 = vector.multi_reduction <add>, %50, %cst_21 [1] : vector<8x10xf32> to vector<8xf32>
    %52 = vector.shape_cast %51 : vector<8xf32> to vector<8x1xf32>
    %cst_22 = arith.constant 0.000000e+00 : f32
    %53 = vector.broadcast %cst_22 : f32 to vector<8x1xf32>
    %54 = arith.subf %53, %52 : vector<8x1xf32>
    %55 = arith.mulf %54, %28 : vector<8x1xf32>
    %cst_23 = arith.constant dense<0.000000e+00> : vector<1xf32>
    %56 = vector.multi_reduction <add>, %55, %cst_23 [0] : vector<8x1xf32> to vector<1xf32>
    %57 = vector.shape_cast %56 : vector<1xf32> to vector<1x1xf32>
    %cst_24 = arith.constant 5.000000e-01 : f32
    %58 = vector.broadcast %cst_24 : f32 to vector<1x1xf32>
    %59 = arith.mulf %57, %58 : vector<1x1xf32>
    %c0_25 = arith.constant 0 : index
    %c0_26 = arith.constant 0 : index
    %60 = vector.load %arg11[%c0_25, %c0_26] : memref<1x1xf32, #tpu.memory_space<vmem>>, vector<1x1xf32>
    tpu.vector_store %arg11[%c0_25, %c0_26], %59 {strides = array<i32>} : memref<1x1xf32, #tpu.memory_space<vmem>>, vector<1x1xf32>,
    %61 = arith.subf %44, %35 : vector<8x10xf32>
    %cst_27 = arith.constant 5.000000e-01 : f32
    %62 = vector.broadcast %cst_27 : f32 to vector<8x1xf32>
    %63 = arith.mulf %28, %62 : vector<8x1xf32>
    %64 = vector.broadcast %63 : vector<8x1xf32> to vector<8x10xf32>
    %65 = arith.mulf %61, %64 : vector<8x10xf32>
    %66 = arith.truncf %65 : vector<8x10xf32> to vector<8x10xbf16>
    %67 = arith.truncf %15 : vector<8x32xf32> to vector<8x32xbf16>
    %cst_28 = arith.constant dense<0.000000e+00> : vector<10x32xf32>
    %68 = tpu.matmul %66, %67, %cst_28 {dimension_numbers = #tpu.dot_dimension_numbers<[0], [0], [1], [1], [0, 1, 1, 1], [], []>} : vector<8x10xbf16>, vector<8x32xbf16>, vector<10x32xf32> -> vector<10x32xf32>
    %cst_29 = arith.constant dense<0.000000e+00> : vector<10xf32>
    %69 = vector.multi_reduction <add>, %65, %cst_29 [0] : vector<8x10xf32> to vector<10xf32>
    %70 = vector.shape_cast %69 : vector<10xf32> to vector<1x10xf32>
    %71 = arith.truncf %7 : vector<10x32xf32> to vector<10x32xbf16>
    %cst_30 = arith.constant dense<0.000000e+00> : vector<8x32xf32>
    %72 = tpu.matmul %66, %71, %cst_30 {dimension_numbers = #tpu.dot_dimension_numbers<[1], [0], [0], [1], [0, 0, 1, 1], [], []>} : vector<8x10xbf16>, vector<10x32xbf16>, vector<8x32xf32> -> vector<8x32xf32>
    %cst_31 = arith.constant 0.000000e+00 : f32
    %73 = vector.broadcast %cst_31 : f32 to vector<8x32xf32>
    %74 = arith.cmpf ogt, %15, %73 : vector<8x32xf32>
    %75 = arith.extui %74 : vector<8x32xi1> to vector<8x32xi32>
    %76 = arith.sitofp %75 : vector<8x32xi32> to vector<8x32xf32>
    %77 = arith.mulf %72, %76 : vector<8x32xf32>
    %78 = arith.truncf %77 : vector<8x32xf32> to vector<8x32xbf16>
    %cst_32 = arith.constant dense<0.000000e+00> : vector<32x1024xf32>
    %79 = tpu.matmul %78, %9, %cst_32 {dimension_numbers = #tpu.dot_dimension_numbers<[0], [0], [1], [1], [0, 1, 1, 1], [], []>} : vector<8x32xbf16>, vector<8x1024xbf16>, vector<32x1024xf32> -> vector<32x1024xf32>
    %cst_33 = arith.constant dense<0.000000e+00> : vector<32xf32>
    %80 = vector.multi_reduction <add>, %77, %cst_33 [0] : vector<8x32xf32> to vector<32xf32>
    %81 = vector.shape_cast %80 : vector<32xf32> to vector<1x32xf32>
    %c0_34 = arith.constant 0 : index
    %c0_35 = arith.constant 0 : index
    %82 = vector.load %arg13[%c0_34, %c0_35] : memref<32x1024xf32, #tpu.memory_space<vmem>>, vector<32x1024xf32>
    %cst_36 = arith.constant 1.000000e+00 : f32
    %83 = vector.broadcast %cst_36 : f32 to vector<32x1024xf32>
    %84 = arith.mulf %83, %82 : vector<32x1024xf32>
    %85 = arith.addf %79, %84 : vector<32x1024xf32>
    %c0_37 = arith.constant 0 : index
    %c0_38 = arith.constant 0 : index
    %86 = vector.load %arg17[%c0_37, %c0_38] : memref<32x1024xf32, #tpu.memory_space<vmem>>, vector<32x1024xf32>
    %cst_39 = arith.constant 0.949999988 : f32
    %87 = vector.broadcast %cst_39 : f32 to vector<32x1024xf32>
    %88 = arith.mulf %86, %87 : vector<32x1024xf32>
    %cst_40 = arith.constant 9.99999974E-5 : f32
    %89 = vector.broadcast %cst_40 : f32 to vector<32x1024xf32>
    %90 = arith.mulf %89, %85 : vector<32x1024xf32>
    %91 = arith.subf %88, %90 : vector<32x1024xf32>
    %c0_41 = arith.constant 0 : index
    %c0_42 = arith.constant 0 : index
    %92 = vector.load %arg17[%c0_41, %c0_42] : memref<32x1024xf32, #tpu.memory_space<vmem>>, vector<32x1024xf32>
    tpu.vector_store %arg17[%c0_41, %c0_42], %91 {strides = array<i32>} : memref<32x1024xf32, #tpu.memory_space<vmem>>, vector<32x1024xf32>,
    %93 = arith.addf %82, %91 : vector<32x1024xf32>
    %c0_43 = arith.constant 0 : index
    %c0_44 = arith.constant 0 : index
    %94 = vector.load %arg13[%c0_43, %c0_44] : memref<32x1024xf32, #tpu.memory_space<vmem>>, vector<32x1024xf32>
    tpu.vector_store %arg13[%c0_43, %c0_44], %93 {strides = array<i32>} : memref<32x1024xf32, #tpu.memory_space<vmem>>, vector<32x1024xf32>,
    %c0_45 = arith.constant 0 : index
    %c0_46 = arith.constant 0 : index
    %95 = vector.load %arg14[%c0_45, %c0_46] : memref<1x32xf32, #tpu.memory_space<vmem>>, vector<1x32xf32>
    %cst_47 = arith.constant 1.000000e+00 : f32
    %96 = vector.broadcast %cst_47 : f32 to vector<1x32xf32>
    %97 = arith.mulf %96, %95 : vector<1x32xf32>
    %98 = arith.addf %81, %97 : vector<1x32xf32>
    %c0_48 = arith.constant 0 : index
    %c0_49 = arith.constant 0 : index
    %99 = vector.load %arg18[%c0_48, %c0_49] : memref<1x32xf32, #tpu.memory_space<vmem>>, vector<1x32xf32>
    %cst_50 = arith.constant 0.949999988 : f32
    %100 = vector.broadcast %cst_50 : f32 to vector<1x32xf32>
    %101 = arith.mulf %99, %100 : vector<1x32xf32>
    %cst_51 = arith.constant 9.99999974E-5 : f32
    %102 = vector.broadcast %cst_51 : f32 to vector<1x32xf32>
    %103 = arith.mulf %102, %98 : vector<1x32xf32>
    %104 = arith.subf %101, %103 : vector<1x32xf32>
    %c0_52 = arith.constant 0 : index
    %c0_53 = arith.constant 0 : index
    %105 = vector.load %arg18[%c0_52, %c0_53] : memref<1x32xf32, #tpu.memory_space<vmem>>, vector<1x32xf32>
    tpu.vector_store %arg18[%c0_52, %c0_53], %104 {strides = array<i32>} : memref<1x32xf32, #tpu.memory_space<vmem>>, vector<1x32xf32>,
    %106 = arith.addf %95, %104 : vector<1x32xf32>
    %c0_54 = arith.constant 0 : index
    %c0_55 = arith.constant 0 : index
    %107 = vector.load %arg14[%c0_54, %c0_55] : memref<1x32xf32, #tpu.memory_space<vmem>>, vector<1x32xf32>
    tpu.vector_store %arg14[%c0_54, %c0_55], %106 {strides = array<i32>} : memref<1x32xf32, #tpu.memory_space<vmem>>, vector<1x32xf32>,
    %c0_56 = arith.constant 0 : index
    %c0_57 = arith.constant 0 : index
    %108 = vector.load %arg15[%c0_56, %c0_57] : memref<10x32xf32, #tpu.memory_space<vmem>>, vector<10x32xf32>
    %cst_58 = arith.constant 1.000000e+00 : f32
    %109 = vector.broadcast %cst_58 : f32 to vector<10x32xf32>
    %110 = arith.mulf %109, %108 : vector<10x32xf32>
    %111 = arith.addf %68, %110 : vector<10x32xf32>
    %c0_59 = arith.constant 0 : index
    %c0_60 = arith.constant 0 : index
    %112 = vector.load %arg19[%c0_59, %c0_60] : memref<10x32xf32, #tpu.memory_space<vmem>>, vector<10x32xf32>
    %cst_61 = arith.constant 0.949999988 : f32
    %113 = vector.broadcast %cst_61 : f32 to vector<10x32xf32>
    %114 = arith.mulf %112, %113 : vector<10x32xf32>
    %cst_62 = arith.constant 1.000000e-03 : f32
    %115 = vector.broadcast %cst_62 : f32 to vector<10x32xf32>
    %116 = arith.mulf %115, %111 : vector<10x32xf32>
    %117 = arith.subf %114, %116 : vector<10x32xf32>
    %c0_63 = arith.constant 0 : index
    %c0_64 = arith.constant 0 : index
    %118 = vector.load %arg19[%c0_63, %c0_64] : memref<10x32xf32, #tpu.memory_space<vmem>>, vector<10x32xf32>
    tpu.vector_store %arg19[%c0_63, %c0_64], %117 {strides = array<i32>} : memref<10x32xf32, #tpu.memory_space<vmem>>, vector<10x32xf32>,
    %119 = arith.addf %108, %117 : vector<10x32xf32>
    %c0_65 = arith.constant 0 : index
    %c0_66 = arith.constant 0 : index
    %120 = vector.load %arg15[%c0_65, %c0_66] : memref<10x32xf32, #tpu.memory_space<vmem>>, vector<10x32xf32>
    tpu.vector_store %arg15[%c0_65, %c0_66], %119 {strides = array<i32>} : memref<10x32xf32, #tpu.memory_space<vmem>>, vector<10x32xf32>,
    %c0_67 = arith.constant 0 : index
    %c0_68 = arith.constant 0 : index
    %121 = vector.load %arg16[%c0_67, %c0_68] : memref<1x10xf32, #tpu.memory_space<vmem>>, vector<1x10xf32>
    %cst_69 = arith.constant 1.000000e+00 : f32
    %122 = vector.broadcast %cst_69 : f32 to vector<1x10xf32>
    %123 = arith.mulf %122, %121 : vector<1x10xf32>
    %124 = arith.addf %70, %123 : vector<1x10xf32>
    %c0_70 = arith.constant 0 : index
    %c0_71 = arith.constant 0 : index
    %125 = vector.load %arg20[%c0_70, %c0_71] : memref<1x10xf32, #tpu.memory_space<vmem>>, vector<1x10xf32>
    %cst_72 = arith.constant 0.949999988 : f32
    %126 = vector.broadcast %cst_72 : f32 to vector<1x10xf32>
    %127 = arith.mulf %125, %126 : vector<1x10xf32>
    %cst_73 = arith.constant 1.000000e-03 : f32
    %128 = vector.broadcast %cst_73 : f32 to vector<1x10xf32>
    %129 = arith.mulf %128, %124 : vector<1x10xf32>
    %130 = arith.subf %127, %129 : vector<1x10xf32>
    %c0_74 = arith.constant 0 : index
    %c0_75 = arith.constant 0 : index
    %131 = vector.load %arg20[%c0_74, %c0_75] : memref<1x10xf32, #tpu.memory_space<vmem>>, vector<1x10xf32>
    tpu.vector_store %arg20[%c0_74, %c0_75], %130 {strides = array<i32>} : memref<1x10xf32, #tpu.memory_space<vmem>>, vector<1x10xf32>,
    %132 = arith.addf %121, %130 : vector<1x10xf32>
    %c0_76 = arith.constant 0 : index
    %c0_77 = arith.constant 0 : index
    %133 = vector.load %arg16[%c0_76, %c0_77] : memref<1x10xf32, #tpu.memory_space<vmem>>, vector<1x10xf32>
    tpu.vector_store %arg16[%c0_76, %c0_77], %132 {strides = array<i32>} : memref<1x10xf32, #tpu.memory_space<vmem>>, vector<1x10xf32>,
    return
  }
  func.func @transform_0(%arg0: i32) -> (i32, i32, i32) {
    %c0_i32 = arith.constant 0 : i32
    %c0_i32_0 = arith.constant 0 : i32
    %c0_i32_1 = arith.constant 0 : i32
    return %arg0, %c0_i32, %c0_i32_0 : i32, i32, i32
  }
  func.func @transform_1(%arg0: i32) -> (i32, i32, i32) {
    %c0_i32 = arith.constant 0 : i32
    %c0_i32_0 = arith.constant 0 : i32
    %c0_i32_1 = arith.constant 0 : i32
    return %arg0, %c0_i32, %c0_i32_0 : i32, i32, i32
  }
  func.func @transform_2(%arg0: i32) -> (i32, i32) {
    %c0_i32 = arith.constant 0 : i32
    %c0_i32_0 = arith.constant 0 : i32
    %c0_i32_1 = arith.constant 0 : i32
    return %c0_i32, %c0_i32_0 : i32, i32
  }
  func.func @transform_3(%arg0: i32) -> (i32, i32) {
    %c0_i32 = arith.constant 0 : i32
    %c0_i32_0 = arith.constant 0 : i32
    %c0_i32_1 = arith.constant 0 : i32
    return %c0_i32, %c0_i32_0 : i32, i32
  }
  func.func @transform_4(%arg0: i32) -> (i32, i32) {
    %c0_i32 = arith.constant 0 : i32
    %c0_i32_0 = arith.constant 0 : i32
    %c0_i32_1 = arith.constant 0 : i32
    return %c0_i32, %c0_i32_0 : i32, i32
  }
  func.func @transform_5(%arg0: i32) -> (i32, i32) {
    %c0_i32 = arith.constant 0 : i32
    %c0_i32_0 = arith.constant 0 : i32
    %c0_i32_1 = arith.constant 0 : i32
    return %c0_i32, %c0_i32_0 : i32, i32
  }
  func.func @transform_6(%arg0: i32) -> (i32, i32) {
    %c0_i32 = arith.constant 0 : i32
    %c0_i32_0 = arith.constant 0 : i32
    %c0_i32_1 = arith.constant 0 : i32
    return %c0_i32, %c0_i32_0 : i32, i32
  }
  func.func @transform_7(%arg0: i32) -> (i32, i32) {
    %c0_i32 = arith.constant 0 : i32
    %c0_i32_0 = arith.constant 0 : i32
    %c0_i32_1 = arith.constant 0 : i32
    return %c0_i32, %c0_i32_0 : i32, i32
  }
  func.func @transform_8(%arg0: i32) -> (i32, i32) {
    %c0_i32 = arith.constant 0 : i32
    %c0_i32_0 = arith.constant 0 : i32
    %c0_i32_1 = arith.constant 0 : i32
    return %c0_i32, %c0_i32_0 : i32, i32
  }
  func.func @transform_9(%arg0: i32) -> (i32, i32) {
    %c0_i32 = arith.constant 0 : i32
    %c0_i32_0 = arith.constant 0 : i32
    %c0_i32_1 = arith.constant 0 : i32
    return %c0_i32, %c0_i32_0 : i32, i32
  }
  func.func @transform_10(%arg0: i32) -> (i32, i32) {
    %c0_i32 = arith.constant 0 : i32
    %c0_i32_0 = arith.constant 0 : i32
    return %arg0, %c0_i32 : i32, i32
  }
  func.func @transform_11(%arg0: i32) -> (i32, i32, i32) {
    %c0_i32 = arith.constant 0 : i32
    %c0_i32_0 = arith.constant 0 : i32
    %c0_i32_1 = arith.constant 0 : i32
    return %arg0, %c0_i32, %c0_i32_0 : i32, i32, i32
  }
  func.func @transform_12(%arg0: i32) -> (i32, i32) {
    %c0_i32 = arith.constant 0 : i32
    %c0_i32_0 = arith.constant 0 : i32
    %c0_i32_1 = arith.constant 0 : i32
    return %c0_i32, %c0_i32_0 : i32, i32
  }
  func.func @transform_13(%arg0: i32) -> (i32, i32) {
    %c0_i32 = arith.constant 0 : i32
    %c0_i32_0 = arith.constant 0 : i32
    %c0_i32_1 = arith.constant 0 : i32
    return %c0_i32, %c0_i32_0 : i32, i32
  }
  func.func @transform_14(%arg0: i32) -> (i32, i32) {
    %c0_i32 = arith.constant 0 : i32
    %c0_i32_0 = arith.constant 0 : i32
    %c0_i32_1 = arith.constant 0 : i32
    return %c0_i32, %c0_i32_0 : i32, i32
  }
  func.func @transform_15(%arg0: i32) -> (i32, i32) {
    %c0_i32 = arith.constant 0 : i32
    %c0_i32_0 = arith.constant 0 : i32
    %c0_i32_1 = arith.constant 0 : i32
    return %c0_i32, %c0_i32_0 : i32, i32
  }
  func.func @transform_16(%arg0: i32) -> (i32, i32) {
    %c0_i32 = arith.constant 0 : i32
    %c0_i32_0 = arith.constant 0 : i32
    %c0_i32_1 = arith.constant 0 : i32
    return %c0_i32, %c0_i32_0 : i32, i32
  }
  func.func @transform_17(%arg0: i32) -> (i32, i32) {
    %c0_i32 = arith.constant 0 : i32
    %c0_i32_0 = arith.constant 0 : i32
    %c0_i32_1 = arith.constant 0 : i32
    return %c0_i32, %c0_i32_0 : i32, i32
  }
  func.func @transform_18(%arg0: i32) -> (i32, i32) {
    %c0_i32 = arith.constant 0 : i32
    %c0_i32_0 = arith.constant 0 : i32
    %c0_i32_1 = arith.constant 0 : i32
    return %c0_i32, %c0_i32_0 : i32, i32
  }
  func.func @transform_19(%arg0: i32) -> (i32, i32) {
    %c0_i32 = arith.constant 0 : i32
    %c0_i32_0 = arith.constant 0 : i32
    %c0_i32_1 = arith.constant 0 : i32
    return %c0_i32, %c0_i32_0 : i32, i32
  }
}

</mosaic_0001>

<llo_original>
// kernel: run.1
$region0: #{run.1}
  #allocation0 [shape = 'u32[]', space=smem, size = 0x4, offset = 0x4, fixed_abs, tag = 'smem constant byte address 0x4 - core index']
  #allocation1 [shape = 'u32[144,128]{1,0:T(1,128)}', space=vmem, size = 0x12000, scoped, tag = 'internal scratch']
  %s0 = inlined_call_operand.vmem [shape: f32[1,8,1024], index: 0, kind: input, shape index: {}]
  %s1 = inlined_call_operand.vmem [shape: s32[1,8,1], index: 1, kind: input, shape index: {}]
  %s2 = inlined_call_operand.vmem [shape: f32[32,1024], index: 2, kind: input, shape index: {}, may-alias: {2,12}]
  %s3 = inlined_call_operand.vmem [shape: f32[1,32], index: 3, kind: input, shape index: {}, may-alias: {3,13}]
  %s4 = inlined_call_operand.vmem [shape: f32[10,32], index: 4, kind: input, shape index: {}, may-alias: {4,14}]
  %s5 = inlined_call_operand.vmem [shape: f32[1,10], index: 5, kind: input, shape index: {}, may-alias: {5,15}]
  %s6 = inlined_call_operand.vmem [shape: f32[32,1024], index: 6, kind: input, shape index: {}, may-alias: {6,16}]
  %s7 = inlined_call_operand.vmem [shape: f32[1,32], index: 7, kind: input, shape index: {}, may-alias: {7,17}]
  %s8 = inlined_call_operand.vmem [shape: f32[10,32], index: 8, kind: input, shape index: {}, may-alias: {8,18}]
  %s9 = inlined_call_operand.vmem [shape: f32[1,10], index: 9, kind: input, shape index: {}, may-alias: {9,19}]
  %s10 = inlined_call_operand.hbm [shape: f32[1,1], index: 10, kind: output, shape index: {0}]
  %s11 = inlined_call_operand.vmem [shape: f32[1,8,10], index: 11, kind: output, shape index: {1}]
  %s12 = inlined_call_operand.vmem [shape: f32[32,1024], index: 12, kind: output, shape index: {2}, may-alias: {2,12}]
  %s13 = inlined_call_operand.vmem [shape: f32[1,32], index: 13, kind: output, shape index: {3}, may-alias: {3,13}]
  %s14 = inlined_call_operand.vmem [shape: f32[10,32], index: 14, kind: output, shape index: {4}, may-alias: {4,14}]
  %s15 = inlined_call_operand.vmem [shape: f32[1,10], index: 15, kind: output, shape index: {5}, may-alias: {5,15}]
  %s16 = inlined_call_operand.vmem [shape: f32[32,1024], index: 16, kind: output, shape index: {6}, may-alias: {6,16}]
  %s17 = inlined_call_operand.vmem [shape: f32[1,32], index: 17, kind: output, shape index: {7}, may-alias: {7,17}]
  %s18 = inlined_call_operand.vmem [shape: f32[10,32], index: 18, kind: output, shape index: {8}, may-alias: {8,18}]
  %s19 = inlined_call_operand.vmem [shape: f32[1,10], index: 19, kind: output, shape index: {9}, may-alias: {9,19}]
  %20 = xla_tuple %s10, %s11, %s12, %s13, %s14, %s15, %s16, %s17, %s18, %s19
  %s21 = sld [smem:[#allocation0]]
  $region126: #{run.1} parent=0
    _
  %s23 = ssub.s32 1, %s21
  %s24 = scalar_select 0, %s23, %s21
  $region1: #{run.1} parent=0
    #allocation2 [shape = 'u8[512]{0}', space=vmem, size = 0x400, scoped, tag = 'output window, operand 0, single buffered']
    #allocation3 [shape = 's32[1]{0}', space=sflag, size = 0x4, scoped, tag = 'scoped memory for run.1']
    %25 = vsyncpa [#allocation3], 0
    // Predicated region
    $region2: #{run.1} parent=1 // pred_check
      _
    $region3: #{run.1} parent=1 // pred_check_branch
      %27 = sbr.rel (0) target = $region5
    $region4: #{run.1} parent=1 // pred_region
      _
    $region5: #{run.1} parent=1 // pred_fallthru
      _
    // Predicated region
    $region6: #{run.1} parent=1 // pred_check
      _
    $region7: #{run.1} parent=1 // pred_check_branch
      %29 = sbr.rel (0) target = $region9
    $region8: #{run.1} parent=1 // pred_region
      _
    $region9: #{run.1} parent=1 // pred_fallthru
      _
    // Predicated region
    $region10: #{run.1} parent=1 // pred_check
      _
    $region11: #{run.1} parent=1 // pred_check_branch
      %31 = sbr.rel (0) target = $region13
    $region12: #{run.1} parent=1 // pred_region
      _
    $region13: #{run.1} parent=1 // pred_fallthru
      _
    // Predicated region
    $region14: #{run.1} parent=1 // pred_check
      _
    $region15: #{run.1} parent=1 // pred_check_branch
      %33 = sbr.rel (0) target = $region17
    $region16: #{run.1} parent=1 // pred_region
      _
    $region17: #{run.1} parent=1 // pred_fallthru
      _
    // Predicated region
    $region18: #{run.1} parent=1 // pred_check
      _
    $region19: #{run.1} parent=1 // pred_check_branch
      %35 = sbr.rel (0) target = $region21
    $region20: #{run.1} parent=1 // pred_region
      _
    $region21: #{run.1} parent=1 // pred_fallthru
      _
    // Predicated region
    $region22: #{run.1} parent=1 // pred_check
      _
    $region23: #{run.1} parent=1 // pred_check_branch
      %37 = sbr.rel (0) target = $region25
    $region24: #{run.1} parent=1 // pred_region
      _
    $region25: #{run.1} parent=1 // pred_fallthru
      _
    // Predicated region
    $region26: #{run.1} parent=1 // pred_check
      _
    $region27: #{run.1} parent=1 // pred_check_branch
      %39 = sbr.rel (0) target = $region29
    $region28: #{run.1} parent=1 // pred_region
      _
    $region29: #{run.1} parent=1 // pred_fallthru
      _
    // Predicated region
    $region30: #{run.1} parent=1 // pred_check
      _
    $region31: #{run.1} parent=1 // pred_check_branch
      %41 = sbr.rel (0) target = $region33
    $region32: #{run.1} parent=1 // pred_region
      _
    $region33: #{run.1} parent=1 // pred_fallthru
      _
    // Predicated region
    $region34: #{run.1} parent=1 // pred_check
      _
    $region35: #{run.1} parent=1 // pred_check_branch
      %43 = sbr.rel (0) target = $region37
    $region36: #{run.1} parent=1 // pred_region
      _
    $region37: #{run.1} parent=1 // pred_fallthru
      _
    // Predicated region
    $region38: #{run.1} parent=1 // pred_check
      _
    $region39: #{run.1} parent=1 // pred_check_branch
      %45 = sbr.rel (0) target = $region41
    $region40: #{run.1} parent=1 // pred_region
      _
    $region41: #{run.1} parent=1 // pred_fallthru
      _
    %p47 = scmp.eq.s32.totalorder 0, 0
    // Predicated region
    $region42: #{run.1} parent=1 // pred_check
      %p48 = pneg %p47
    $region43: #{run.1} parent=1 // pred_check_branch
      %50 = sbr.rel (%p48) target = $region45
    $region44: #{run.1} parent=1 // pred_region
      %v51 = vld [vmem:[%s2] sm:$0xff]
      %v52 = vld [vmem:[%s2 + $0x8] sm:$0xff]
      %v53 = vld [vmem:[%s2 + $0x10] sm:$0xff]
      %v54 = vld [vmem:[%s2 + $0x18] sm:$0xff]
      %v55 = vld [vmem:[%s2 + $0x20] sm:$0xff]
      %v56 = vld [vmem:[%s2 + $0x28] sm:$0xff]
      %v57 = vld [vmem:[%s2 + $0x30] sm:$0xff]
      %v58 = vld [vmem:[%s2 + $0x38] sm:$0xff]
      %v59 = vld [vmem:[%s2 + $0x40] sm:$0xff]
      %v60 = vld [vmem:[%s2 + $0x48] sm:$0xff]
      %v61 = vld [vmem:[%s2 + $0x50] sm:$0xff]
      %v62 = vld [vmem:[%s2 + $0x58] sm:$0xff]
      %v63 = vld [vmem:[%s2 + $0x60] sm:$0xff]
      %v64 = vld [vmem:[%s2 + $0x68] sm:$0xff]
      %v65 = vld [vmem:[%s2 + $0x70] sm:$0xff]
      %v66 = vld [vmem:[%s2 + $0x78] sm:$0xff]
      %v67 = vld [vmem:[%s2 + $0x80] sm:$0xff]
      %v68 = vld [vmem:[%s2 + $0x88] sm:$0xff]
      %v69 = vld [vmem:[%s2 + $0x90] sm:$0xff]
      %v70 = vld [vmem:[%s2 + $0x98] sm:$0xff]
      %v71 = vld [vmem:[%s2 + $0xa0] sm:$0xff]
      %v72 = vld [vmem:[%s2 + $0xa8] sm:$0xff]
      %v73 = vld [vmem:[%s2 + $0xb0] sm:$0xff]
      %v74 = vld [vmem:[%s2 + $0xb8] sm:$0xff]
      %v75 = vld [vmem:[%s2 + $0xc0] sm:$0xff]
      %v76 = vld [vmem:[%s2 + $0xc8] sm:$0xff]
      %v77 = vld [vmem:[%s2 + $0xd0] sm:$0xff]
      %v78 = vld [vmem:[%s2 + $0xd8] sm:$0xff]
      %v79 = vld [vmem:[%s2 + $0xe0] sm:$0xff]
      %v80 = vld [vmem:[%s2 + $0xe8] sm:$0xff]
      %v81 = vld [vmem:[%s2 + $0xf0] sm:$0xff]
      %v82 = vld [vmem:[%s2 + $0xf8] sm:$0xff]
      %83 = vst [vmem:[%s12] sm:$0xff] %v51
      %84 = vst [vmem:[%s12 + $0x8] sm:$0xff] %v52
      %85 = vst [vmem:[%s12 + $0x10] sm:$0xff] %v53
      %86 = vst [vmem:[%s12 + $0x18] sm:$0xff] %v54
      %87 = vst [vmem:[%s12 + $0x20] sm:$0xff] %v55
      %88 = vst [vmem:[%s12 + $0x28] sm:$0xff] %v56
      %89 = vst [vmem:[%s12 + $0x30] sm:$0xff] %v57
      %90 = vst [vmem:[%s12 + $0x38] sm:$0xff] %v58
      %91 = vst [vmem:[%s12 + $0x40] sm:$0xff] %v59
      %92 = vst [vmem:[%s12 + $0x48] sm:$0xff] %v60
      %93 = vst [vmem:[%s12 + $0x50] sm:$0xff] %v61
      %94 = vst [vmem:[%s12 + $0x58] sm:$0xff] %v62
      %95 = vst [vmem:[%s12 + $0x60] sm:$0xff] %v63
      %96 = vst [vmem:[%s12 + $0x68] sm:$0xff] %v64
      %97 = vst [vmem:[%s12 + $0x70] sm:$0xff] %v65
      %98 = vst [vmem:[%s12 + $0x78] sm:$0xff] %v66
      %99 = vst [vmem:[%s12 + $0x80] sm:$0xff] %v67
      %100 = vst [vmem:[%s12 + $0x88] sm:$0xff] %v68
      %101 = vst [vmem:[%s12 + $0x90] sm:$0xff] %v69
      %102 = vst [vmem:[%s12 + $0x98] sm:$0xff] %v70
      %103 = vst [vmem:[%s12 + $0xa0] sm:$0xff] %v71
      %104 = vst [vmem:[%s12 + $0xa8] sm:$0xff] %v72
      %105 = vst [vmem:[%s12 + $0xb0] sm:$0xff] %v73
      %106 = vst [vmem:[%s12 + $0xb8] sm:$0xff] %v74
      %107 = vst [vmem:[%s12 + $0xc0] sm:$0xff] %v75
      %108 = vst [vmem:[%s12 + $0xc8] sm:$0xff] %v76
      %109 = vst [vmem:[%s12 + $0xd0] sm:$0xff] %v77
      %110 = vst [vmem:[%s12 + $0xd8] sm:$0xff] %v78
      %111 = vst [vmem:[%s12 + $0xe0] sm:$0xff] %v79
      %112 = vst [vmem:[%s12 + $0xe8] sm:$0xff] %v80
      %113 = vst [vmem:[%s12 + $0xf0] sm:$0xff] %v81
      %114 = vst [vmem:[%s12 + $0xf8] sm:$0xff] %v82
      %v115 = vld [vmem:[%s3] sm:$0x1]
      %vm116 = vcmask 253952
      %117 = vst.msk [vmem:[%s13] sm:$0x1] %vm116, %v115
      %v118 = vld [vmem:[%s4] sm:$0xff]
      %v119 = vld [vmem:[%s4 + $0x8] sm:$0x3]
      %vm120 = vcmask 261120
      %121 = vst.msk [vmem:[%s14] sm:$0xff] %vm120, %v118
      %vm122 = vcmask 254976
      %123 = vst.msk [vmem:[%s14 + $0x8] sm:$0x3] %vm122, %v119
      %v124 = vld [vmem:[%s5] sm:$0x1]
      %vm125 = vcmask 73728
      %126 = vst.msk [vmem:[%s15] sm:$0x1] %vm125, %v124
      %v127 = vld [vmem:[%s6] sm:$0xff]
      %v128 = vld [vmem:[%s6 + $0x8] sm:$0xff]
      %v129 = vld [vmem:[%s6 + $0x10] sm:$0xff]
      %v130 = vld [vmem:[%s6 + $0x18] sm:$0xff]
      %v131 = vld [vmem:[%s6 + $0x20] sm:$0xff]
      %v132 = vld [vmem:[%s6 + $0x28] sm:$0xff]
      %v133 = vld [vmem:[%s6 + $0x30] sm:$0xff]
      %v134 = vld [vmem:[%s6 + $0x38] sm:$0xff]
      %v135 = vld [vmem:[%s6 + $0x40] sm:$0xff]
      %v136 = vld [vmem:[%s6 + $0x48] sm:$0xff]
      %v137 = vld [vmem:[%s6 + $0x50] sm:$0xff]
      %v138 = vld [vmem:[%s6 + $0x58] sm:$0xff]
      %v139 = vld [vmem:[%s6 + $0x60] sm:$0xff]
      %v140 = vld [vmem:[%s6 + $0x68] sm:$0xff]
      %v141 = vld [vmem:[%s6 + $0x70] sm:$0xff]
      %v142 = vld [vmem:[%s6 + $0x78] sm:$0xff]
      %v143 = vld [vmem:[%s6 + $0x80] sm:$0xff]
      %v144 = vld [vmem:[%s6 + $0x88] sm:$0xff]
      %v145 = vld [vmem:[%s6 + $0x90] sm:$0xff]
      %v146 = vld [vmem:[%s6 + $0x98] sm:$0xff]
      %v147 = vld [vmem:[%s6 + $0xa0] sm:$0xff]
      %v148 = vld [vmem:[%s6 + $0xa8] sm:$0xff]
      %v149 = vld [vmem:[%s6 + $0xb0] sm:$0xff]
      %v150 = vld [vmem:[%s6 + $0xb8] sm:$0xff]
      %v151 = vld [vmem:[%s6 + $0xc0] sm:$0xff]
      %v152 = vld [vmem:[%s6 + $0xc8] sm:$0xff]
      %v153 = vld [vmem:[%s6 + $0xd0] sm:$0xff]
      %v154 = vld [vmem:[%s6 + $0xd8] sm:$0xff]
      %v155 = vld [vmem:[%s6 + $0xe0] sm:$0xff]
      %v156 = vld [vmem:[%s6 + $0xe8] sm:$0xff]
      %v157 = vld [vmem:[%s6 + $0xf0] sm:$0xff]
      %v158 = vld [vmem:[%s6 + $0xf8] sm:$0xff]
      %159 = vst [vmem:[%s16] sm:$0xff] %v127
      %160 = vst [vmem:[%s16 + $0x8] sm:$0xff] %v128
      %161 = vst [vmem:[%s16 + $0x10] sm:$0xff] %v129
      %162 = vst [vmem:[%s16 + $0x18] sm:$0xff] %v130
      %163 = vst [vmem:[%s16 + $0x20] sm:$0xff] %v131
      %164 = vst [vmem:[%s16 + $0x28] sm:$0xff] %v132
      %165 = vst [vmem:[%s16 + $0x30] sm:$0xff] %v133
      %166 = vst [vmem:[%s16 + $0x38] sm:$0xff] %v134
      %167 = vst [vmem:[%s16 + $0x40] sm:$0xff] %v135
      %168 = vst [vmem:[%s16 + $0x48] sm:$0xff] %v136
      %169 = vst [vmem:[%s16 + $0x50] sm:$0xff] %v137
      %170 = vst [vmem:[%s16 + $0x58] sm:$0xff] %v138
      %171 = vst [vmem:[%s16 + $0x60] sm:$0xff] %v139
      %172 = vst [vmem:[%s16 + $0x68] sm:$0xff] %v140
      %173 = vst [vmem:[%s16 + $0x70] sm:$0xff] %v141
      %174 = vst [vmem:[%s16 + $0x78] sm:$0xff] %v142
      %175 = vst [vmem:[%s16 + $0x80] sm:$0xff] %v143
      %176 = vst [vmem:[%s16 + $0x88] sm:$0xff] %v144
      %177 = vst [vmem:[%s16 + $0x90] sm:$0xff] %v145
      %178 = vst [vmem:[%s16 + $0x98] sm:$0xff] %v146
      %179 = vst [vmem:[%s16 + $0xa0] sm:$0xff] %v147
      %180 = vst [vmem:[%s16 + $0xa8] sm:$0xff] %v148
      %181 = vst [vmem:[%s16 + $0xb0] sm:$0xff] %v149
      %182 = vst [vmem:[%s16 + $0xb8] sm:$0xff] %v150
      %183 = vst [vmem:[%s16 + $0xc0] sm:$0xff] %v151
      %184 = vst [vmem:[%s16 + $0xc8] sm:$0xff] %v152
      %185 = vst [vmem:[%s16 + $0xd0] sm:$0xff] %v153
      %186 = vst [vmem:[%s16 + $0xd8] sm:$0xff] %v154
      %187 = vst [vmem:[%s16 + $0xe0] sm:$0xff] %v155
      %188 = vst [vmem:[%s16 + $0xe8] sm:$0xff] %v156
      %189 = vst [vmem:[%s16 + $0xf0] sm:$0xff] %v157
      %190 = vst [vmem:[%s16 + $0xf8] sm:$0xff] %v158
      %v191 = vld [vmem:[%s7] sm:$0x1]
      %192 = vst.msk [vmem:[%s17] sm:$0x1] %vm116, %v191
      %v193 = vld [vmem:[%s8] sm:$0xff]
      %v194 = vld [vmem:[%s8 + $0x8] sm:$0x3]
      %195 = vst.msk [vmem:[%s18] sm:$0xff] %vm120, %v193
      %196 = vst.msk [vmem:[%s18 + $0x8] sm:$0x3] %vm122, %v194
      %v197 = vld [vmem:[%s9] sm:$0x1]
      %198 = vst.msk [vmem:[%s19] sm:$0x1] %vm125, %v197
    $region45: #{run.1} parent=1 // pred_fallthru
      _
    %v199 = vld [vmem:[%s0] sm:$0xff]
    %v200 = vld [vmem:[%s0 + $0x8] sm:$0xff]
    %v201 = vld [vmem:[%s0 + $0x10] sm:$0xff]
    %v202 = vld [vmem:[%s0 + $0x18] sm:$0xff]
    %v203 = vld [vmem:[%s0 + $0x20] sm:$0xff]
    %v204 = vld [vmem:[%s0 + $0x28] sm:$0xff]
    %v205 = vld [vmem:[%s0 + $0x30] sm:$0xff]
    %v206 = vld [vmem:[%s0 + $0x38] sm:$0xff]
    %v207 = vld [vmem:[%s12] sm:$0xff]
    %v208 = vld [vmem:[%s12 + $0x8] sm:$0xff]
    %v209 = vld [vmem:[%s12 + $0x10] sm:$0xff]
    %v210 = vld [vmem:[%s12 + $0x18] sm:$0xff]
    %v211 = vld [vmem:[%s12 + $0x20] sm:$0xff]
    %v212 = vld [vmem:[%s12 + $0x28] sm:$0xff]
    %v213 = vld [vmem:[%s12 + $0x30] sm:$0xff]
    %v214 = vld [vmem:[%s12 + $0x38] sm:$0xff]
    %v215 = vld [vmem:[%s12 + $0x40] sm:$0xff]
    %v216 = vld [vmem:[%s12 + $0x48] sm:$0xff]
    %v217 = vld [vmem:[%s12 + $0x50] sm:$0xff]
    %v218 = vld [vmem:[%s12 + $0x58] sm:$0xff]
    %v219 = vld [vmem:[%s12 + $0x60] sm:$0xff]
    %v220 = vld [vmem:[%s12 + $0x68] sm:$0xff]
    %v221 = vld [vmem:[%s12 + $0x70] sm:$0xff]
    %v222 = vld [vmem:[%s12 + $0x78] sm:$0xff]
    %v223 = vld [vmem:[%s12 + $0x80] sm:$0xff]
    %v224 = vld [vmem:[%s12 + $0x88] sm:$0xff]
    %v225 = vld [vmem:[%s12 + $0x90] sm:$0xff]
    %v226 = vld [vmem:[%s12 + $0x98] sm:$0xff]
    %v227 = vld [vmem:[%s12 + $0xa0] sm:$0xff]
    %v228 = vld [vmem:[%s12 + $0xa8] sm:$0xff]
    %v229 = vld [vmem:[%s12 + $0xb0] sm:$0xff]
    %v230 = vld [vmem:[%s12 + $0xb8] sm:$0xff]
    %v231 = vld [vmem:[%s12 + $0xc0] sm:$0xff]
    %v232 = vld [vmem:[%s12 + $0xc8] sm:$0xff]
    %v233 = vld [vmem:[%s12 + $0xd0] sm:$0xff]
    %v234 = vld [vmem:[%s12 + $0xd8] sm:$0xff]
    %v235 = vld [vmem:[%s12 + $0xe0] sm:$0xff]
    %v236 = vld [vmem:[%s12 + $0xe8] sm:$0xff]
    %v237 = vld [vmem:[%s12 + $0xf0] sm:$0xff]
    %v238 = vld [vmem:[%s12 + $0xf8] sm:$0xff]
    %v239 = vld [vmem:[%s13] sm:$0x1]
    %v240 = vld [vmem:[%s14] sm:$0xff]
    %v241 = vld [vmem:[%s14 + $0x8] sm:$0x3]
    %v242 = vld [vmem:[%s15] sm:$0x1]
    %v243 = vpack.c.bf16 %v199, %v199
    %v244 = vpack.c.bf16 %v200, %v200
    %v245 = vpack.c.bf16 %v201, %v201
    %v246 = vpack.c.bf16 %v202, %v202
    %v247 = vpack.c.bf16 %v203, %v203
    %v248 = vpack.c.bf16 %v204, %v204
    %v249 = vpack.c.bf16 %v205, %v205
    %v250 = vpack.c.bf16 %v206, %v206
    %v251 = vpack.c.bf16 %v215, %v207
    %v252 = vpack.c.bf16 %v216, %v208
    %v253 = vpack.c.bf16 %v217, %v209
    %v254 = vpack.c.bf16 %v218, %v210
    %v255 = vpack.c.bf16 %v219, %v211
    %v256 = vpack.c.bf16 %v220, %v212
    %v257 = vpack.c.bf16 %v221, %v213
    %v258 = vpack.c.bf16 %v222, %v214
    %v259 = vpack.c.bf16 %v231, %v223
    %v260 = vpack.c.bf16 %v232, %v224
    %v261 = vpack.c.bf16 %v233, %v225
    %v262 = vpack.c.bf16 %v234, %v226
    %v263 = vpack.c.bf16 %v235, %v227
    %v264 = vpack.c.bf16 %v236, %v228
    %v265 = vpack.c.bf16 %v237, %v229
    %v266 = vpack.c.bf16 %v238, %v230
    %v268 = vlaneseq
    %v269 = vshrl.u32 %v268, 7
    %v270 = vsub.s32 0, %v269
    %v271 = vrot.slane %v239, %v270
    %273 = vmatprep.subr.bf16.mxu0 %v252
    %274 = vmatpush1.bf16.xpose.msra.mxu0 %v251
    %275 = vmatprep.subr.bf16.mxu0 %v260
    %276 = vmatpush1.bf16.xpose.msra.mxu0 %v259
    %277 = vmatprep.subr.bf16.mxu0 0
    %278 = vmatpush1.bf16.xpose.msra.mxu0 0
    %279 = vmatprep.subr.bf16.mxu0 0
    %280 = vmatpush1.bf16.xpose.msra.mxu0 0
    %281 = vmatprep.subr.bf16.mxu0 0
    %282 = vmatpush1.bf16.xpose.msra.mxu0 0
    %283 = vmatprep.subr.bf16.mxu0 0
    %284 = vmatpush1.bf16.xpose.msra.mxu0 0
    %285 = vmatprep.subr.bf16.mxu0 0
    %286 = vmatpush1.bf16.xpose.msra.mxu0 0
    %287 = vmatprep.subr.bf16.mxu0 0
    %288 = vmatpush1.bf16.xpose.msra.mxu0 0
    %289 = vmatprep.subr.bf16.mxu0 0
    %290 = vmatpush1.bf16.xpose.msra.mxu0 0
    %291 = vmatprep.subr.bf16.mxu0 0
    %292 = vmatpush1.bf16.xpose.msra.mxu0 0
    %293 = vmatprep.subr.bf16.mxu0 0
    %294 = vmatpush1.bf16.xpose.msra.mxu0 0
    %295 = vmatprep.subr.bf16.mxu0 0
    %296 = vmatpush1.bf16.xpose.msra.mxu0 0
    %297 = vmatprep.subr.bf16.mxu0 0
    %298 = vmatpush1.bf16.xpose.msra.mxu0 0
    %299 = vmatprep.subr.bf16.mxu0 0
    %300 = vmatpush1.bf16.xpose.msra.mxu0 0
    %301 = vmatprep.subr.bf16.mxu0 0
    %302 = vmatpush1.bf16.xpose.msra.mxu0 0
    %303 = vmatprep.subr.bf16.mxu0 0
    %304 = vmatpush1.bf16.xpose.msra.mxu0 0
    %305 = vmatprep.mubr.bf16.mxu0 %v244
    %306 = vmatmul.mubr.bf16.gmra.mrb[0].mxu0 %v243
    %v307 = vpop.f32.mrb[0].mxu0
    %v308 = vadd.f32 %v271, %v307
    %v309 = vpop.f32.mrb[0].mxu0
    %v310 = vpop.f32.mrb[0].mxu0
    %v311 = vpop.f32.mrb[0].mxu0
    %312 = vdwg.mxu0
    %313 = vmatprep.subr.bf16.mxu0 %v254
    %314 = vmatpush1.bf16.xpose.msra.mxu0 %v253
    %315 = vmatprep.subr.bf16.mxu0 %v262
    %316 = vmatpush1.bf16.xpose.msra.mxu0 %v261
    %317 = vmatprep.subr.bf16.mxu0 0
    %318 = vmatpush1.bf16.xpose.msra.mxu0 0
    %319 = vmatprep.subr.bf16.mxu0 0
    %320 = vmatpush1.bf16.xpose.msra.mxu0 0
    %321 = vmatprep.subr.bf16.mxu0 0
    %322 = vmatpush1.bf16.xpose.msra.mxu0 0
    %323 = vmatprep.subr.bf16.mxu0 0
    %324 = vmatpush1.bf16.xpose.msra.mxu0 0
    %325 = vmatprep.subr.bf16.mxu0 0
    %326 = vmatpush1.bf16.xpose.msra.mxu0 0
    %327 = vmatprep.subr.bf16.mxu0 0
    %328 = vmatpush1.bf16.xpose.msra.mxu0 0
    %329 = vmatprep.subr.bf16.mxu0 0
    %330 = vmatpush1.bf16.xpose.msra.mxu0 0
    %331 = vmatprep.subr.bf16.mxu0 0
    %332 = vmatpush1.bf16.xpose.msra.mxu0 0
    %333 = vmatprep.subr.bf16.mxu0 0
    %334 = vmatpush1.bf16.xpose.msra.mxu0 0
    %335 = vmatprep.subr.bf16.mxu0 0
    %336 = vmatpush1.bf16.xpose.msra.mxu0 0
    %337 = vmatprep.subr.bf16.mxu0 0
    %338 = vmatpush1.bf16.xpose.msra.mxu0 0
    %339 = vmatprep.subr.bf16.mxu0 0
    %340 = vmatpush1.bf16.xpose.msra.mxu0 0
    %341 = vmatprep.subr.bf16.mxu0 0
    %342 = vmatpush1.bf16.xpose.msra.mxu0 0
    %343 = vmatprep.subr.bf16.mxu0 0
    %344 = vmatpush1.bf16.xpose.msra.mxu0 0
    %345 = vmatprep.mubr.bf16.mxu0 %v246
    %346 = vmatmul.mubr.bf16.gmra.mrb[0].mxu0 %v245
    %v347 = vpop.f32.mrb[0].mxu0
    %v348 = vadd.f32 %v308, %v347
    %v349 = vpop.f32.mrb[0].mxu0
    %v350 = vpop.f32.mrb[0].mxu0
    %v351 = vpop.f32.mrb[0].mxu0
    %352 = vdwg.mxu0
    %353 = vmatprep.subr.bf16.mxu0 %v256
    %354 = vmatpush1.bf16.xpose.msra.mxu0 %v255
    %355 = vmatprep.subr.bf16.mxu0 %v264
    %356 = vmatpush1.bf16.xpose.msra.mxu0 %v263
    %357 = vmatprep.subr.bf16.mxu0 0
    %358 = vmatpush1.bf16.xpose.msra.mxu0 0
    %359 = vmatprep.subr.bf16.mxu0 0
    %360 = vmatpush1.bf16.xpose.msra.mxu0 0
    %361 = vmatprep.subr.bf16.mxu0 0
    %362 = vmatpush1.bf16.xpose.msra.mxu0 0
    %363 = vmatprep.subr.bf16.mxu0 0
    %364 = vmatpush1.bf16.xpose.msra.mxu0 0
    %365 = vmatprep.subr.bf16.mxu0 0
    %366 = vmatpush1.bf16.xpose.msra.mxu0 0
    %367 = vmatprep.subr.bf16.mxu0 0
    %368 = vmatpush1.bf16.xpose.msra.mxu0 0
    %369 = vmatprep.subr.bf16.mxu0 0
    %370 = vmatpush1.bf16.xpose.msra.mxu0 0
    %371 = vmatprep.subr.bf16.mxu0 0
    %372 = vmatpush1.bf16.xpose.msra.mxu0 0
    %373 = vmatprep.subr.bf16.mxu0 0
    %374 = vmatpush1.bf16.xpose.msra.mxu0 0
    %375 = vmatprep.subr.bf16.mxu0 0
    %376 = vmatpush1.bf16.xpose.msra.mxu0 0
    %377 = vmatprep.subr.bf16.mxu0 0
    %378 = vmatpush1.bf16.xpose.msra.mxu0 0
    %379 = vmatprep.subr.bf16.mxu0 0
    %380 = vmatpush1.bf16.xpose.msra.mxu0 0
    %381 = vmatprep.subr.bf16.mxu0 0
    %382 = vmatpush1.bf16.xpose.msra.mxu0 0
    %383 = vmatprep.subr.bf16.mxu0 0
    %384 = vmatpush1.bf16.xpose.msra.mxu0 0
    %385 = vmatprep.mubr.bf16.mxu0 %v248
    %386 = vmatmul.mubr.bf16.gmra.mrb[0].mxu0 %v247
    %v387 = vpop.f32.mrb[0].mxu0
    %v388 = vadd.f32 %v348, %v387
    %v389 = vpop.f32.mrb[0].mxu0
    %v390 = vpop.f32.mrb[0].mxu0
    %v391 = vpop.f32.mrb[0].mxu0
    %392 = vdwg.mxu0
    %393 = vmatprep.subr.bf16.mxu0 %v258
    %394 = vmatpush1.bf16.xpose.msra.mxu0 %v257
    %395 = vmatprep.subr.bf16.mxu0 %v266
    %396 = vmatpush1.bf16.xpose.msra.mxu0 %v265
    %397 = vmatprep.subr.bf16.mxu0 0
    %398 = vmatpush1.bf16.xpose.msra.mxu0 0
    %399 = vmatprep.subr.bf16.mxu0 0
    %400 = vmatpush1.bf16.xpose.msra.mxu0 0
    %401 = vmatprep.subr.bf16.mxu0 0
    %402 = vmatpush1.bf16.xpose.msra.mxu0 0
    %403 = vmatprep.subr.bf16.mxu0 0
    %404 = vmatpush1.bf16.xpose.msra.mxu0 0
    %405 = vmatprep.subr.bf16.mxu0 0
    %406 = vmatpush1.bf16.xpose.msra.mxu0 0
    %407 = vmatprep.subr.bf16.mxu0 0
    %408 = vmatpush1.bf16.xpose.msra.mxu0 0
    %409 = vmatprep.subr.bf16.mxu0 0
    %410 = vmatpush1.bf16.xpose.msra.mxu0 0
    %411 = vmatprep.subr.bf16.mxu0 0
    %412 = vmatpush1.bf16.xpose.msra.mxu0 0
    %413 = vmatprep.subr.bf16.mxu0 0
    %414 = vmatpush1.bf16.xpose.msra.mxu0 0
    %415 = vmatprep.subr.bf16.mxu0 0
    %416 = vmatpush1.bf16.xpose.msra.mxu0 0
    %417 = vmatprep.subr.bf16.mxu0 0
    %418 = vmatpush1.bf16.xpose.msra.mxu0 0
    %419 = vmatprep.subr.bf16.mxu0 0
    %420 = vmatpush1.bf16.xpose.msra.mxu0 0
    %421 = vmatprep.subr.bf16.mxu0 0
    %422 = vmatpush1.bf16.xpose.msra.mxu0 0
    %423 = vmatprep.subr.bf16.mxu0 0
    %424 = vmatpush1.bf16.xpose.msra.mxu0 0
    %425 = vmatprep.mubr.bf16.mxu0 %v250
    %426 = vmatmul.mubr.bf16.gmra.mrb[0].mxu0 %v249
    %v427 = vpop.f32.mrb[0].mxu0
    %v428 = vadd.f32 %v388, %v427
    %v429 = vpop.f32.mrb[0].mxu0
    %v430 = vpop.f32.mrb[0].mxu0
    %v431 = vpop.f32.mrb[0].mxu0
    %432 = vdwg.mxu0
    %v433 = vmax.f32 %v428, 0.0
    %v434 = vpack.c.bf16 %v433, %v433
    %v435 = vpack.c.bf16 %v241, %v240
    %v437 = vlaneseq
    %v438 = vshrl.u32 %v437, 7
    %v439 = vsub.s32 0, %v438
    %v440 = vrot.slane %v242, %v439
    %vm442 = vcmask 261120
    %v444 = vsel %vm442, %v434, 0
    %v447 = vsel %vm442, %v435, 0
    %449 = vmatprep.subr.bf16.mxu0 0
    %450 = vmatpush1.bf16.xpose.msra.mxu0 %v447
    %451 = vmatprep.subr.bf16.mxu0 0
    %452 = vmatpush1.bf16.xpose.msra.mxu0 0
    %453 = vmatprep.subr.bf16.mxu0 0
    %454 = vmatpush1.bf16.xpose.msra.mxu0 0
    %455 = vmatprep.subr.bf16.mxu0 0
    %456 = vmatpush1.bf16.xpose.msra.mxu0 0
    %457 = vmatprep.subr.bf16.mxu0 0
    %458 = vmatpush1.bf16.xpose.msra.mxu0 0
    %459 = vmatprep.subr.bf16.mxu0 0
    %460 = vmatpush1.bf16.xpose.msra.mxu0 0
    %461 = vmatprep.subr.bf16.mxu0 0
    %462 = vmatpush1.bf16.xpose.msra.mxu0 0
    %463 = vmatprep.subr.bf16.mxu0 0
    %464 = vmatpush1.bf16.xpose.msra.mxu0 0
    %465 = vmatprep.subr.bf16.mxu0 0
    %466 = vmatpush1.bf16.xpose.msra.mxu0 0
    %467 = vmatprep.subr.bf16.mxu0 0
    %468 = vmatpush1.bf16.xpose.msra.mxu0 0
    %469 = vmatprep.subr.bf16.mxu0 0
    %470 = vmatpush1.bf16.xpose.msra.mxu0 0
    %471 = vmatprep.subr.bf16.mxu0 0
    %472 = vmatpush1.bf16.xpose.msra.mxu0 0
    %473 = vmatprep.subr.bf16.mxu0 0
    %474 = vmatpush1.bf16.xpose.msra.mxu0 0
    %475 = vmatprep.subr.bf16.mxu0 0
    %476 = vmatpush1.bf16.xpose.msra.mxu0 0
    %477 = vmatprep.subr.bf16.mxu0 0
    %478 = vmatpush1.bf16.xpose.msra.mxu0 0
    %479 = vmatprep.subr.bf16.mxu0 0
    %480 = vmatpush1.bf16.xpose.msra.mxu0 0
    %481 = vmatprep.mubr.bf16.mxu0 0
    %482 = vmatmul.mubr.bf16.gmra.mrb[0].mxu0 %v444
    %v483 = vpop.f32.mrb[0].mxu0
    %v484 = vadd.f32 %v440, %v483
    %v485 = vpop.f32.mrb[0].mxu0
    %v486 = vpop.f32.mrb[0].mxu0
    %v487 = vpop.f32.mrb[0].mxu0
    %488 = vdwg.mxu0
    %vm489 = vcmask 80896
    %490 = vst.msk [vmem:[%s11] sm:$0xff] %vm489, %v484
    %v491 = vlaneseq
    %v492 = vshrl.u32 %v491, 7
    %vm493 = vcmp.lt.s32.totalorder %v492, 2
    %v494 = vsel %vm493, 1, 0
    %v495 = vcvt.s32.f32 %v494
    %v496 = vlaneseq
    %v497 = vand.u32 %v496, 127
    %v498 = vld [vmem:[%s1] sm:$0xff]
    %499 = vset.pattern.permute.xlu0 0
    %500 = vperm.xlu0 %499, %v498
    %v501 = vpop.permute.xlu0 %500
    %vm502 = vcmp.eq.s32.totalorder %v497, %v501
    %v503 = vsel %vm502, 1, 0
    %v504 = vcvt.s32.f32 %v503
    %v505 = vsel %vm489, %v484, -inf
    %506 = vmax.xlane.f32.xlu0 %v505
    %v507 = vpop.xlane.xlu0 %506
    %v508 = vsub.f32 %v484, %v507
    %v509 = vmul.f32 %v508, 1.442695
    %v510 = vpow.pop %v509
    %v511 = vsel %vm489, %v510, 0.0
    %512 = vadd.xlane.f32.xlu0 %v511
    %v513 = vpop.xlane.xlu0 %512
    %v514 = vrcp.pop %v513
    %v515 = vmul.f32 %v510, %v514
    %v516 = vlog2.pop %v513
    %v517 = vmul.f32 %v516, 0.6931472
    %v518 = vsub.f32 %v508, %v517
    %v519 = vmul.f32 %v504, %v518
    %v520 = vsel %vm489, %v519, 0.0
    %521 = vadd.xlane.f32.xlu0 %v520
    %v522 = vpop.xlane.xlu0 %521
    %v523 = vsub.f32 0.0, %v522
    %v524 = vmul.f32 %v523, %v495
    %v525 = vrot.slane %v524, 4
    %v526 = vadd.f32 %v524, %v525
    %v527 = vrot.slane %v526, 2
    %v528 = vadd.f32 %v526, %v527
    %v529 = vrot.slane %v528, 1
    %v530 = vadd.f32 %v528, %v529
    %v531 = vmul.f32 %v530, 0.5
    %vm532 = vcmask 0
    %533 = vst.msk [vmem:[#allocation2] sm:$0x1] %vm532, %v531
    %v534 = vsub.f32 %v515, %v504
    %v535 = vmul.f32 %v495, 0.5
    %v536 = vmul.f32 %v534, %v535
    %v537 = vpack.c.bf16 %v536, %v536
    %v538 = vsel %vm489, %v536, 0.0
    %v539 = vrot.slane %v538, 4
    %v540 = vadd.f32 %v538, %v539
    %v541 = vrot.slane %v540, 2
    %v542 = vadd.f32 %v540, %v541
    %v543 = vrot.slane %v542, 1
    %v544 = vadd.f32 %v542, %v543
    %v546 = vsel %vm489, %v537, 0
    %vm548 = vcmask 1044480
    %v549 = vsel %vm548, %v435, 0
    %551 = vmatprep.subr.bf16.mxu0 0
    %552 = vmatpush1.bf16.msra.mxu0 %v549
    %553 = vmatprep.subr.bf16.mxu0 0
    %554 = vmatpush1.bf16.msra.mxu0 0
    %555 = vmatprep.subr.bf16.mxu0 0
    %556 = vmatpush1.bf16.msra.mxu0 0
    %557 = vmatprep.subr.bf16.mxu0 0
    %558 = vmatpush1.bf16.msra.mxu0 0
    %559 = vmatprep.subr.bf16.mxu0 0
    %560 = vmatpush1.bf16.msra.mxu0 0
    %561 = vmatprep.subr.bf16.mxu0 0
    %562 = vmatpush1.bf16.msra.mxu0 0
    %563 = vmatprep.subr.bf16.mxu0 0
    %564 = vmatpush1.bf16.msra.mxu0 0
    %565 = vmatprep.subr.bf16.mxu0 0
    %566 = vmatpush1.bf16.msra.mxu0 0
    %567 = vmatprep.subr.bf16.mxu0 0
    %568 = vmatpush1.bf16.msra.mxu0 0
    %569 = vmatprep.subr.bf16.mxu0 0
    %570 = vmatpush1.bf16.msra.mxu0 0
    %571 = vmatprep.subr.bf16.mxu0 0
    %572 = vmatpush1.bf16.msra.mxu0 0
    %573 = vmatprep.subr.bf16.mxu0 0
    %574 = vmatpush1.bf16.msra.mxu0 0
    %575 = vmatprep.subr.bf16.mxu0 0
    %576 = vmatpush1.bf16.msra.mxu0 0
    %577 = vmatprep.subr.bf16.mxu0 0
    %578 = vmatpush1.bf16.msra.mxu0 0
    %579 = vmatprep.subr.bf16.mxu0 0
    %580 = vmatpush1.bf16.msra.mxu0 0
    %581 = vmatprep.subr.bf16.mxu0 0
    %582 = vmatpush1.bf16.msra.mxu0 0
    %583 = vmatprep.mubr.bf16.mxu0 0
    %584 = vmatmul.mubr.bf16.gmra.mrb[0].mxu0 %v546
    %v585 = vpop.f32.mrb[0].mxu0
    %v586 = vadd.f32 0.0, %v585
    %v587 = vpop.f32.mrb[0].mxu0
    %v588 = vpop.f32.mrb[0].mxu0
    %v589 = vpop.f32.mrb[0].mxu0
    %590 = vdwg.mxu0
    %vm591 = vcmp.gt.f32.partialorder %v433, 0.0
    %v592 = vsel %vm591, 1, 0
    %v593 = vcvt.s32.f32 %v592
    %v594 = vmul.f32 %v586, %v593
    %v595 = vpack.c.bf16 %v594, %v594
    %v596 = vsel %vm442, %v594, 0.0
    %v597 = vrot.slane %v596, 4
    %v598 = vadd.f32 %v596, %v597
    %v599 = vrot.slane %v598, 2
    %v600 = vadd.f32 %v598, %v599
    %v601 = vrot.slane %v600, 1
    %v602 = vadd.f32 %v600, %v601
    %v603 = vld [vmem:[%s12] sm:$0xff]
    %v604 = vld [vmem:[%s12 + $0x8] sm:$0xff]
    %v605 = vld [vmem:[%s12 + $0x10] sm:$0xff]
    %v606 = vld [vmem:[%s12 + $0x18] sm:$0xff]
    %v607 = vld [vmem:[%s12 + $0x20] sm:$0xff]
    %v608 = vld [vmem:[%s12 + $0x28] sm:$0xff]
    %v609 = vld [vmem:[%s12 + $0x30] sm:$0xff]
    %v610 = vld [vmem:[%s12 + $0x38] sm:$0xff]
    %v611 = vld [vmem:[%s12 + $0x40] sm:$0xff]
    %v612 = vld [vmem:[%s12 + $0x48] sm:$0xff]
    %v613 = vld [vmem:[%s12 + $0x50] sm:$0xff]
    %v614 = vld [vmem:[%s12 + $0x58] sm:$0xff]
    %v615 = vld [vmem:[%s12 + $0x60] sm:$0xff]
    %v616 = vld [vmem:[%s12 + $0x68] sm:$0xff]
    %v617 = vld [vmem:[%s12 + $0x70] sm:$0xff]
    %v618 = vld [vmem:[%s12 + $0x78] sm:$0xff]
    %v619 = vld [vmem:[%s12 + $0x80] sm:$0xff]
    %v620 = vld [vmem:[%s12 + $0x88] sm:$0xff]
    %v621 = vld [vmem:[%s12 + $0x90] sm:$0xff]
    %v622 = vld [vmem:[%s12 + $0x98] sm:$0xff]
    %v623 = vld [vmem:[%s12 + $0xa0] sm:$0xff]
    %v624 = vld [vmem:[%s12 + $0xa8] sm:$0xff]
    %v625 = vld [vmem:[%s12 + $0xb0] sm:$0xff]
    %v626 = vld [vmem:[%s12 + $0xb8] sm:$0xff]
    %v627 = vld [vmem:[%s12 + $0xc0] sm:$0xff]
    %v628 = vld [vmem:[%s12 + $0xc8] sm:$0xff]
    %v629 = vld [vmem:[%s12 + $0xd0] sm:$0xff]
    %v630 = vld [vmem:[%s12 + $0xd8] sm:$0xff]
    %v631 = vld [vmem:[%s12 + $0xe0] sm:$0xff]
    %v632 = vld [vmem:[%s12 + $0xe8] sm:$0xff]
    %v633 = vld [vmem:[%s12 + $0xf0] sm:$0xff]
    %v634 = vld [vmem:[%s12 + $0xf8] sm:$0xff]
    %635 = vxpose.xlu0.c.b16.start [1/8] %v595, 128
    %636 = vxpose.xlu0.c.b16.cont [2/8] 0, 128
    %637 = vxpose.xlu0.c.b16.cont [3/8] 0, 128
    %638 = vxpose.xlu0.c.b16.cont [4/8] 0, 128
    %639 = vxpose.xlu0.c.b16.cont [5/8] 0, 128
    %640 = vxpose.xlu0.c.b16.cont [6/8] 0, 128
    %641 = vxpose.xlu0.c.b16.cont [7/8] 0, 128
    %642 = vxpose.xlu0.c.b16.end [8/8] 0, 128
    %v643 = vpop.trf.xlu0
    %v644 = vpop.trf.xlu0
    %v645 = vpop.trf.xlu0
    %v646 = vpop.trf.xlu0
    %v647 = vpop.trf.xlu0
    %v648 = vpop.trf.xlu0
    %v649 = vpop.trf.xlu0
    %v650 = vpop.trf.xlu0
    %vm651 = vcmask 64512
    %v653 = vsel %vm651, %v643, 0
    %v656 = vsel %vm651, %v644, 0
    %vm658 = vcmask 1043456
    %v660 = vsel %vm658, %v243, 0
    %v663 = vsel %vm658, %v244, 0
    %v666 = vsel %vm658, %v245, 0
    %v669 = vsel %vm658, %v246, 0
    %v672 = vsel %vm658, %v247, 0
    %v675 = vsel %vm658, %v248, 0
    %v678 = vsel %vm658, %v249, 0
    %v681 = vsel %vm658, %v250, 0
    %683 = vmatprep.subr.bf16.mxu0 %v663
    %684 = vmatpush1.bf16.msra.mxu0 %v660
    %685 = vmatprep.subr.bf16.mxu0 0
    %686 = vmatpush1.bf16.msra.mxu0 0
    %687 = vmatprep.subr.bf16.mxu0 0
    %688 = vmatpush1.bf16.msra.mxu0 0
    %689 = vmatprep.subr.bf16.mxu0 0
    %690 = vmatpush1.bf16.msra.mxu0 0
    %691 = vmatprep.subr.bf16.mxu0 0
    %692 = vmatpush1.bf16.msra.mxu0 0
    %693 = vmatprep.subr.bf16.mxu0 0
    %694 = vmatpush1.bf16.msra.mxu0 0
    %695 = vmatprep.subr.bf16.mxu0 0
    %696 = vmatpush1.bf16.msra.mxu0 0
    %697 = vmatprep.subr.bf16.mxu0 0
    %698 = vmatpush1.bf16.msra.mxu0 0
    %699 = vmatprep.subr.bf16.mxu0 0
    %700 = vmatpush1.bf16.msra.mxu0 0
    %701 = vmatprep.subr.bf16.mxu0 0
    %702 = vmatpush1.bf16.msra.mxu0 0
    %703 = vmatprep.subr.bf16.mxu0 0
    %704 = vmatpush1.bf16.msra.mxu0 0
    %705 = vmatprep.subr.bf16.mxu0 0
    %706 = vmatpush1.bf16.msra.mxu0 0
    %707 = vmatprep.subr.bf16.mxu0 0
    %708 = vmatpush1.bf16.msra.mxu0 0
    %709 = vmatprep.subr.bf16.mxu0 0
    %710 = vmatpush1.bf16.msra.mxu0 0
    %711 = vmatprep.subr.bf16.mxu0 0
    %712 = vmatpush1.bf16.msra.mxu0 0
    %713 = vmatprep.subr.bf16.mxu0 0
    %714 = vmatpush1.bf16.msra.mxu0 0
    %715 = vmatprep.mubr.bf16.mxu0 0
    %716 = vmatmul.mubr.bf16.gmra.mrb[0].mxu0 %v653
    %v717 = vpop.f32.mrb[0].mxu0
    %v718 = vadd.f32 %v603, %v717
    %v719 = vpop.f32.mrb[0].mxu0
    %v720 = vadd.f32 %v604, %v719
    %v721 = vpop.f32.mrb[0].mxu0
    %v722 = vadd.f32 %v611, %v721
    %v723 = vpop.f32.mrb[0].mxu0
    %v724 = vadd.f32 %v612, %v723
    %725 = vmatprep.mubr.bf16.mxu0 0
    %726 = vmatmul.mubr.bf16.gmra.mrb[0].mxu0 %v656
    %v727 = vpop.f32.mrb[0].mxu0
    %v728 = vadd.f32 %v619, %v727
    %v729 = vpop.f32.mrb[0].mxu0
    %v730 = vadd.f32 %v620, %v729
    %v731 = vpop.f32.mrb[0].mxu0
    %v732 = vadd.f32 %v627, %v731
    %v733 = vpop.f32.mrb[0].mxu0
    %v734 = vadd.f32 %v628, %v733
    %735 = vdwg.mxu0
    %736 = vmatprep.subr.bf16.mxu0 %v669
    %737 = vmatpush1.bf16.msra.mxu0 %v666
    %738 = vmatprep.subr.bf16.mxu0 0
    %739 = vmatpush1.bf16.msra.mxu0 0
    %740 = vmatprep.subr.bf16.mxu0 0
    %741 = vmatpush1.bf16.msra.mxu0 0
    %742 = vmatprep.subr.bf16.mxu0 0
    %743 = vmatpush1.bf16.msra.mxu0 0
    %744 = vmatprep.subr.bf16.mxu0 0
    %745 = vmatpush1.bf16.msra.mxu0 0
    %746 = vmatprep.subr.bf16.mxu0 0
    %747 = vmatpush1.bf16.msra.mxu0 0
    %748 = vmatprep.subr.bf16.mxu0 0
    %749 = vmatpush1.bf16.msra.mxu0 0
    %750 = vmatprep.subr.bf16.mxu0 0
    %751 = vmatpush1.bf16.msra.mxu0 0
    %752 = vmatprep.subr.bf16.mxu0 0
    %753 = vmatpush1.bf16.msra.mxu0 0
    %754 = vmatprep.subr.bf16.mxu0 0
    %755 = vmatpush1.bf16.msra.mxu0 0
    %756 = vmatprep.subr.bf16.mxu0 0
    %757 = vmatpush1.bf16.msra.mxu0 0
    %758 = vmatprep.subr.bf16.mxu0 0
    %759 = vmatpush1.bf16.msra.mxu0 0
    %760 = vmatprep.subr.bf16.mxu0 0
    %761 = vmatpush1.bf16.msra.mxu0 0
    %762 = vmatprep.subr.bf16.mxu0 0
    %763 = vmatpush1.bf16.msra.mxu0 0
    %764 = vmatprep.subr.bf16.mxu0 0
    %765 = vmatpush1.bf16.msra.mxu0 0
    %766 = vmatprep.subr.bf16.mxu0 0
    %767 = vmatpush1.bf16.msra.mxu0 0
    %768 = vmatprep.mubr.bf16.mxu0 0
    %769 = vmatmul.mubr.bf16.gmra.mrb[0].mxu0 %v653
    %v770 = vpop.f32.mrb[0].mxu0
    %v771 = vadd.f32 %v605, %v770
    %v772 = vpop.f32.mrb[0].mxu0
    %v773 = vadd.f32 %v606, %v772
    %v774 = vpop.f32.mrb[0].mxu0
    %v775 = vadd.f32 %v613, %v774
    %v776 = vpop.f32.mrb[0].mxu0
    %v777 = vadd.f32 %v614, %v776
    %778 = vmatprep.mubr.bf16.mxu0 0
    %779 = vmatmul.mubr.bf16.gmra.mrb[0].mxu0 %v656
    %v780 = vpop.f32.mrb[0].mxu0
    %v781 = vadd.f32 %v621, %v780
    %v782 = vpop.f32.mrb[0].mxu0
    %v783 = vadd.f32 %v622, %v782
    %v784 = vpop.f32.mrb[0].mxu0
    %v785 = vadd.f32 %v629, %v784
    %v786 = vpop.f32.mrb[0].mxu0
    %v787 = vadd.f32 %v630, %v786
    %788 = vdwg.mxu0
    %789 = vmatprep.subr.bf16.mxu0 %v675
    %790 = vmatpush1.bf16.msra.mxu0 %v672
    %791 = vmatprep.subr.bf16.mxu0 0
    %792 = vmatpush1.bf16.msra.mxu0 0
    %793 = vmatprep.subr.bf16.mxu0 0
    %794 = vmatpush1.bf16.msra.mxu0 0
    %795 = vmatprep.subr.bf16.mxu0 0
    %796 = vmatpush1.bf16.msra.mxu0 0
    %797 = vmatprep.subr.bf16.mxu0 0
    %798 = vmatpush1.bf16.msra.mxu0 0
    %799 = vmatprep.subr.bf16.mxu0 0
    %800 = vmatpush1.bf16.msra.mxu0 0
    %801 = vmatprep.subr.bf16.mxu0 0
    %802 = vmatpush1.bf16.msra.mxu0 0
    %803 = vmatprep.subr.bf16.mxu0 0
    %804 = vmatpush1.bf16.msra.mxu0 0
    %805 = vmatprep.subr.bf16.mxu0 0
    %806 = vmatpush1.bf16.msra.mxu0 0
    %807 = vmatprep.subr.bf16.mxu0 0
    %808 = vmatpush1.bf16.msra.mxu0 0
    %809 = vmatprep.subr.bf16.mxu0 0
    %810 = vmatpush1.bf16.msra.mxu0 0
    %811 = vmatprep.subr.bf16.mxu0 0
    %812 = vmatpush1.bf16.msra.mxu0 0
    %813 = vmatprep.subr.bf16.mxu0 0
    %814 = vmatpush1.bf16.msra.mxu0 0
    %815 = vmatprep.subr.bf16.mxu0 0
    %816 = vmatpush1.bf16.msra.mxu0 0
    %817 = vmatprep.subr.bf16.mxu0 0
    %818 = vmatpush1.bf16.msra.mxu0 0
    %819 = vmatprep.subr.bf16.mxu0 0
    %820 = vmatpush1.bf16.msra.mxu0 0
    %821 = vmatprep.mubr.bf16.mxu0 0
    %822 = vmatmul.mubr.bf16.gmra.mrb[0].mxu0 %v653
    %v823 = vpop.f32.mrb[0].mxu0
    %v824 = vadd.f32 %v607, %v823
    %v825 = vpop.f32.mrb[0].mxu0
    %v826 = vadd.f32 %v608, %v825
    %v827 = vpop.f32.mrb[0].mxu0
    %v828 = vadd.f32 %v615, %v827
    %v829 = vpop.f32.mrb[0].mxu0
    %v830 = vadd.f32 %v616, %v829
    %831 = vmatprep.mubr.bf16.mxu0 0
    %832 = vmatmul.mubr.bf16.gmra.mrb[0].mxu0 %v656
    %v833 = vpop.f32.mrb[0].mxu0
    %v834 = vadd.f32 %v623, %v833
    %v835 = vpop.f32.mrb[0].mxu0
    %v836 = vadd.f32 %v624, %v835
    %v837 = vpop.f32.mrb[0].mxu0
    %v838 = vadd.f32 %v631, %v837
    %v839 = vpop.f32.mrb[0].mxu0
    %v840 = vadd.f32 %v632, %v839
    %841 = vdwg.mxu0
    %842 = vmatprep.subr.bf16.mxu0 %v681
    %843 = vmatpush1.bf16.msra.mxu0 %v678
    %844 = vmatprep.subr.bf16.mxu0 0
    %845 = vmatpush1.bf16.msra.mxu0 0
    %846 = vmatprep.subr.bf16.mxu0 0
    %847 = vmatpush1.bf16.msra.mxu0 0
    %848 = vmatprep.subr.bf16.mxu0 0
    %849 = vmatpush1.bf16.msra.mxu0 0
    %850 = vmatprep.subr.bf16.mxu0 0
    %851 = vmatpush1.bf16.msra.mxu0 0
    %852 = vmatprep.subr.bf16.mxu0 0
    %853 = vmatpush1.bf16.msra.mxu0 0
    %854 = vmatprep.subr.bf16.mxu0 0
    %855 = vmatpush1.bf16.msra.mxu0 0
    %856 = vmatprep.subr.bf16.mxu0 0
    %857 = vmatpush1.bf16.msra.mxu0 0
    %858 = vmatprep.subr.bf16.mxu0 0
    %859 = vmatpush1.bf16.msra.mxu0 0
    %860 = vmatprep.subr.bf16.mxu0 0
    %861 = vmatpush1.bf16.msra.mxu0 0
    %862 = vmatprep.subr.bf16.mxu0 0
    %863 = vmatpush1.bf16.msra.mxu0 0
    %864 = vmatprep.subr.bf16.mxu0 0
    %865 = vmatpush1.bf16.msra.mxu0 0
    %866 = vmatprep.subr.bf16.mxu0 0
    %867 = vmatpush1.bf16.msra.mxu0 0
    %868 = vmatprep.subr.bf16.mxu0 0
    %869 = vmatpush1.bf16.msra.mxu0 0
    %870 = vmatprep.subr.bf16.mxu0 0
    %871 = vmatpush1.bf16.msra.mxu0 0
    %872 = vmatprep.subr.bf16.mxu0 0
    %873 = vmatpush1.bf16.msra.mxu0 0
    %874 = vmatprep.mubr.bf16.mxu0 0
    %875 = vmatmul.mubr.bf16.gmra.mrb[0].mxu0 %v653
    %v876 = vpop.f32.mrb[0].mxu0
    %v877 = vadd.f32 %v609, %v876
    %v878 = vpop.f32.mrb[0].mxu0
    %v879 = vadd.f32 %v610, %v878
    %v880 = vpop.f32.mrb[0].mxu0
    %v881 = vadd.f32 %v617, %v880
    %v882 = vpop.f32.mrb[0].mxu0
    %v883 = vadd.f32 %v618, %v882
    %884 = vmatprep.mubr.bf16.mxu0 0
    %885 = vmatmul.mubr.bf16.gmra.mrb[0].mxu0 %v656
    %v886 = vpop.f32.mrb[0].mxu0
    %v887 = vadd.f32 %v625, %v886
    %v888 = vpop.f32.mrb[0].mxu0
    %v889 = vadd.f32 %v626, %v888
    %v890 = vpop.f32.mrb[0].mxu0
    %v891 = vadd.f32 %v633, %v890
    %v892 = vpop.f32.mrb[0].mxu0
    %v893 = vadd.f32 %v634, %v892
    %894 = vdwg.mxu0
    %v895 = vld [vmem:[%s16] sm:$0xff]
    %v896 = vld [vmem:[%s16 + $0x8] sm:$0xff]
    %v897 = vld [vmem:[%s16 + $0x10] sm:$0xff]
    %v898 = vld [vmem:[%s16 + $0x18] sm:$0xff]
    %v899 = vld [vmem:[%s16 + $0x20] sm:$0xff]
    %v900 = vld [vmem:[%s16 + $0x28] sm:$0xff]
    %v901 = vld [vmem:[%s16 + $0x30] sm:$0xff]
    %v902 = vld [vmem:[%s16 + $0x38] sm:$0xff]
    %v903 = vld [vmem:[%s16 + $0x40] sm:$0xff]
    %v904 = vld [vmem:[%s16 + $0x48] sm:$0xff]
    %v905 = vld [vmem:[%s16 + $0x50] sm:$0xff]
    %v906 = vld [vmem:[%s16 + $0x58] sm:$0xff]
    %v907 = vld [vmem:[%s16 + $0x60] sm:$0xff]
    %v908 = vld [vmem:[%s16 + $0x68] sm:$0xff]
    %v909 = vld [vmem:[%s16 + $0x70] sm:$0xff]
    %v910 = vld [vmem:[%s16 + $0x78] sm:$0xff]
    %v911 = vld [vmem:[%s16 + $0x80] sm:$0xff]
    %v912 = vld [vmem:[%s16 + $0x88] sm:$0xff]
    %v913 = vld [vmem:[%s16 + $0x90] sm:$0xff]
    %v914 = vld [vmem:[%s16 + $0x98] sm:$0xff]
    %v915 = vld [vmem:[%s16 + $0xa0] sm:$0xff]
    %v916 = vld [vmem:[%s16 + $0xa8] sm:$0xff]
    %v917 = vld [vmem:[%s16 + $0xb0] sm:$0xff]
    %v918 = vld [vmem:[%s16 + $0xb8] sm:$0xff]
    %v919 = vld [vmem:[%s16 + $0xc0] sm:$0xff]
    %v920 = vld [vmem:[%s16 + $0xc8] sm:$0xff]
    %v921 = vld [vmem:[%s16 + $0xd0] sm:$0xff]
    %v922 = vld [vmem:[%s16 + $0xd8] sm:$0xff]
    %v923 = vld [vmem:[%s16 + $0xe0] sm:$0xff]
    %v924 = vld [vmem:[%s16 + $0xe8] sm:$0xff]
    %v925 = vld [vmem:[%s16 + $0xf0] sm:$0xff]
    %v926 = vld [vmem:[%s16 + $0xf8] sm:$0xff]
    %v927 = vmul.f32 %v895, 0.95
    %v928 = vmul.f32 %v896, 0.95
    %v929 = vmul.f32 %v897, 0.95
    %v930 = vmul.f32 %v898, 0.95
    %v931 = vmul.f32 %v899, 0.95
    %v932 = vmul.f32 %v900, 0.95
    %v933 = vmul.f32 %v901, 0.95
    %v934 = vmul.f32 %v902, 0.95
    %v935 = vmul.f32 %v903, 0.95
    %v936 = vmul.f32 %v904, 0.95
    %v937 = vmul.f32 %v905, 0.95
    %v938 = vmul.f32 %v906, 0.95
    %v939 = vmul.f32 %v907, 0.95
    %v940 = vmul.f32 %v908, 0.95
    %v941 = vmul.f32 %v909, 0.95
    %v942 = vmul.f32 %v910, 0.95
    %v943 = vmul.f32 %v911, 0.95
    %v944 = vmul.f32 %v912, 0.95
    %v945 = vmul.f32 %v913, 0.95
    %v946 = vmul.f32 %v914, 0.95
    %v947 = vmul.f32 %v915, 0.95
    %v948 = vmul.f32 %v916, 0.95
    %v949 = vmul.f32 %v917, 0.95
    %v950 = vmul.f32 %v918, 0.95
    %v951 = vmul.f32 %v919, 0.95
    %v952 = vmul.f32 %v920, 0.95
    %v953 = vmul.f32 %v921, 0.95
    %v954 = vmul.f32 %v922, 0.95
    %v955 = vmul.f32 %v923, 0.95
    %v956 = vmul.f32 %v924, 0.95
    %v957 = vmul.f32 %v925, 0.95
    %v958 = vmul.f32 %v926, 0.95
    %v959 = vmul.f32 %v718, 0.0001
    %v960 = vmul.f32 %v720, 0.0001
    %v961 = vmul.f32 %v771, 0.0001
    %v962 = vmul.f32 %v773, 0.0001
    %v963 = vmul.f32 %v824, 0.0001
    %v964 = vmul.f32 %v826, 0.0001
    %v965 = vmul.f32 %v877, 0.0001
    %v966 = vmul.f32 %v879, 0.0001
    %v967 = vmul.f32 %v722, 0.0001
    %v968 = vmul.f32 %v724, 0.0001
    %v969 = vmul.f32 %v775, 0.0001
    %v970 = vmul.f32 %v777, 0.0001
    %v971 = vmul.f32 %v828, 0.0001
    %v972 = vmul.f32 %v830, 0.0001
    %v973 = vmul.f32 %v881, 0.0001
    %v974 = vmul.f32 %v883, 0.0001
    %v975 = vmul.f32 %v728, 0.0001
    %v976 = vmul.f32 %v730, 0.0001
    %v977 = vmul.f32 %v781, 0.0001
    %v978 = vmul.f32 %v783, 0.0001
    %v979 = vmul.f32 %v834, 0.0001
    %v980 = vmul.f32 %v836, 0.0001
    %v981 = vmul.f32 %v887, 0.0001
    %v982 = vmul.f32 %v889, 0.0001
    %v983 = vmul.f32 %v732, 0.0001
    %v984 = vmul.f32 %v734, 0.0001
    %v985 = vmul.f32 %v785, 0.0001
    %v986 = vmul.f32 %v787, 0.0001
    %v987 = vmul.f32 %v838, 0.0001
    %v988 = vmul.f32 %v840, 0.0001
    %v989 = vmul.f32 %v891, 0.0001
    %v990 = vmul.f32 %v893, 0.0001
    %v991 = vsub.f32 %v927, %v959
    %v992 = vsub.f32 %v928, %v960
    %v993 = vsub.f32 %v929, %v961
    %v994 = vsub.f32 %v930, %v962
    %v995 = vsub.f32 %v931, %v963
    %v996 = vsub.f32 %v932, %v964
    %v997 = vsub.f32 %v933, %v965
    %v998 = vsub.f32 %v934, %v966
    %v999 = vsub.f32 %v935, %v967
    %v1000 = vsub.f32 %v936, %v968
    %v1001 = vsub.f32 %v937, %v969
    %v1002 = vsub.f32 %v938, %v970
    %v1003 = vsub.f32 %v939, %v971
    %v1004 = vsub.f32 %v940, %v972
    %v1005 = vsub.f32 %v941, %v973
    %v1006 = vsub.f32 %v942, %v974
    %v1007 = vsub.f32 %v943, %v975
    %v1008 = vsub.f32 %v944, %v976
    %v1009 = vsub.f32 %v945, %v977
    %v1010 = vsub.f32 %v946, %v978
    %v1011 = vsub.f32 %v947, %v979
    %v1012 = vsub.f32 %v948, %v980
    %v1013 = vsub.f32 %v949, %v981
    %v1014 = vsub.f32 %v950, %v982
    %v1015 = vsub.f32 %v951, %v983
    %v1016 = vsub.f32 %v952, %v984
    %v1017 = vsub.f32 %v953, %v985
    %v1018 = vsub.f32 %v954, %v986
    %v1019 = vsub.f32 %v955, %v987
    %v1020 = vsub.f32 %v956, %v988
    %v1021 = vsub.f32 %v957, %v989
    %v1022 = vsub.f32 %v958, %v990
    %1023 = vst [vmem:[%s16] sm:$0xff] %v991
    %1024 = vst [vmem:[%s16 + $0x8] sm:$0xff] %v992
    %1025 = vst [vmem:[%s16 + $0x10] sm:$0xff] %v993
    %1026 = vst [vmem:[%s16 + $0x18] sm:$0xff] %v994
    %1027 = vst [vmem:[%s16 + $0x20] sm:$0xff] %v995
    %1028 = vst [vmem:[%s16 + $0x28] sm:$0xff] %v996
    %1029 = vst [vmem:[%s16 + $0x30] sm:$0xff] %v997
    %1030 = vst [vmem:[%s16 + $0x38] sm:$0xff] %v998
    %1031 = vst [vmem:[%s16 + $0x40] sm:$0xff] %v999
    %1032 = vst [vmem:[%s16 + $0x48] sm:$0xff] %v1000
    %1033 = vst [vmem:[%s16 + $0x50] sm:$0xff] %v1001
    %1034 = vst [vmem:[%s16 + $0x58] sm:$0xff] %v1002
    %1035 = vst [vmem:[%s16 + $0x60] sm:$0xff] %v1003
    %1036 = vst [vmem:[%s16 + $0x68] sm:$0xff] %v1004
    %1037 = vst [vmem:[%s16 + $0x70] sm:$0xff] %v1005
    %1038 = vst [vmem:[%s16 + $0x78] sm:$0xff] %v1006
    %1039 = vst [vmem:[%s16 + $0x80] sm:$0xff] %v1007
    %1040 = vst [vmem:[%s16 + $0x88] sm:$0xff] %v1008
    %1041 = vst [vmem:[%s16 + $0x90] sm:$0xff] %v1009
    %1042 = vst [vmem:[%s16 + $0x98] sm:$0xff] %v1010
    %1043 = vst [vmem:[%s16 + $0xa0] sm:$0xff] %v1011
    %1044 = vst [vmem:[%s16 + $0xa8] sm:$0xff] %v1012
    %1045 = vst [vmem:[%s16 + $0xb0] sm:$0xff] %v1013
    %1046 = vst [vmem:[%s16 + $0xb8] sm:$0xff] %v1014
    %1047 = vst [vmem:[%s16 + $0xc0] sm:$0xff] %v1015
    %1048 = vst [vmem:[%s16 + $0xc8] sm:$0xff] %v1016
    %1049 = vst [vmem:[%s16 + $0xd0] sm:$0xff] %v1017
    %1050 = vst [vmem:[%s16 + $0xd8] sm:$0xff] %v1018
    %1051 = vst [vmem:[%s16 + $0xe0] sm:$0xff] %v1019
    %1052 = vst [vmem:[%s16 + $0xe8] sm:$0xff] %v1020
    %1053 = vst [vmem:[%s16 + $0xf0] sm:$0xff] %v1021
    %1054 = vst [vmem:[%s16 + $0xf8] sm:$0xff] %v1022
    %v1055 = vadd.f32 %v603, %v991
    %v1056 = vadd.f32 %v604, %v992
    %v1057 = vadd.f32 %v605, %v993
    %v1058 = vadd.f32 %v606, %v994
    %v1059 = vadd.f32 %v607, %v995
    %v1060 = vadd.f32 %v608, %v996
    %v1061 = vadd.f32 %v609, %v997
    %v1062 = vadd.f32 %v610, %v998
    %v1063 = vadd.f32 %v611, %v999
    %v1064 = vadd.f32 %v612, %v1000
    %v1065 = vadd.f32 %v613, %v1001
    %v1066 = vadd.f32 %v614, %v1002
    %v1067 = vadd.f32 %v615, %v1003
    %v1068 = vadd.f32 %v616, %v1004
    %v1069 = vadd.f32 %v617, %v1005
    %v1070 = vadd.f32 %v618, %v1006
    %v1071 = vadd.f32 %v619, %v1007
    %v1072 = vadd.f32 %v620, %v1008
    %v1073 = vadd.f32 %v621, %v1009
    %v1074 = vadd.f32 %v622, %v1010
    %v1075 = vadd.f32 %v623, %v1011
    %v1076 = vadd.f32 %v624, %v1012
    %v1077 = vadd.f32 %v625, %v1013
    %v1078 = vadd.f32 %v626, %v1014
    %v1079 = vadd.f32 %v627, %v1015
    %v1080 = vadd.f32 %v628, %v1016
    %v1081 = vadd.f32 %v629, %v1017
    %v1082 = vadd.f32 %v630, %v1018
    %v1083 = vadd.f32 %v631, %v1019
    %v1084 = vadd.f32 %v632, %v1020
    %v1085 = vadd.f32 %v633, %v1021
    %v1086 = vadd.f32 %v634, %v1022
    %1087 = vst [vmem:[%s12] sm:$0xff] %v1055
    %1088 = vst [vmem:[%s12 + $0x8] sm:$0xff] %v1056
    %1089 = vst [vmem:[%s12 + $0x10] sm:$0xff] %v1057
    %1090 = vst [vmem:[%s12 + $0x18] sm:$0xff] %v1058
    %1091 = vst [vmem:[%s12 + $0x20] sm:$0xff] %v1059
    %1092 = vst [vmem:[%s12 + $0x28] sm:$0xff] %v1060
    %1093 = vst [vmem:[%s12 + $0x30] sm:$0xff] %v1061
    %1094 = vst [vmem:[%s12 + $0x38] sm:$0xff] %v1062
    %1095 = vst [vmem:[%s12 + $0x40] sm:$0xff] %v1063
    %1096 = vst [vmem:[%s12 + $0x48] sm:$0xff] %v1064
    %1097 = vst [vmem:[%s12 + $0x50] sm:$0xff] %v1065
    %1098 = vst [vmem:[%s12 + $0x58] sm:$0xff] %v1066
    %1099 = vst [vmem:[%s12 + $0x60] sm:$0xff] %v1067
    %1100 = vst [vmem:[%s12 + $0x68] sm:$0xff] %v1068
    %1101 = vst [vmem:[%s12 + $0x70] sm:$0xff] %v1069
    %1102 = vst [vmem:[%s12 + $0x78] sm:$0xff] %v1070
    %1103 = vst [vmem:[%s12 + $0x80] sm:$0xff] %v1071
    %1104 = vst [vmem:[%s12 + $0x88] sm:$0xff] %v1072
    %1105 = vst [vmem:[%s12 + $0x90] sm:$0xff] %v1073
    %1106 = vst [vmem:[%s12 + $0x98] sm:$0xff] %v1074
    %1107 = vst [vmem:[%s12 + $0xa0] sm:$0xff] %v1075
    %1108 = vst [vmem:[%s12 + $0xa8] sm:$0xff] %v1076
    %1109 = vst [vmem:[%s12 + $0xb0] sm:$0xff] %v1077
    %1110 = vst [vmem:[%s12 + $0xb8] sm:$0xff] %v1078
    %1111 = vst [vmem:[%s12 + $0xc0] sm:$0xff] %v1079
    %1112 = vst [vmem:[%s12 + $0xc8] sm:$0xff] %v1080
    %1113 = vst [vmem:[%s12 + $0xd0] sm:$0xff] %v1081
    %1114 = vst [vmem:[%s12 + $0xd8] sm:$0xff] %v1082
    %1115 = vst [vmem:[%s12 + $0xe0] sm:$0xff] %v1083
    %1116 = vst [vmem:[%s12 + $0xe8] sm:$0xff] %v1084
    %1117 = vst [vmem:[%s12 + $0xf0] sm:$0xff] %v1085
    %1118 = vst [vmem:[%s12 + $0xf8] sm:$0xff] %v1086
    %v1119 = vld [vmem:[%s13] sm:$0x1]
    %v1120 = vadd.f32 %v602, %v1119
    %v1121 = vld [vmem:[%s17] sm:$0x1]
    %v1122 = vmul.f32 %v1121, 0.95
    %v1123 = vmul.f32 %v1120, 0.0001
    %v1124 = vsub.f32 %v1122, %v1123
    %vm1125 = vcmask 253952
    %1126 = vst.msk [vmem:[%s17] sm:$0x1] %vm1125, %v1124
    %v1127 = vadd.f32 %v1119, %v1124
    %1128 = vst.msk [vmem:[%s13] sm:$0x1] %vm1125, %v1127
    %v1129 = vld [vmem:[%s14] sm:$0xff]
    %v1130 = vld [vmem:[%s14 + $0x8] sm:$0x3]
    %1131 = vxpose.xlu0.c.b16.start [1/8] %v537, 128
    %1132 = vxpose.xlu0.c.b16.cont [2/8] 0, 128
    %1133 = vxpose.xlu0.c.b16.cont [3/8] 0, 128
    %1134 = vxpose.xlu0.c.b16.cont [4/8] 0, 128
    %1135 = vxpose.xlu0.c.b16.cont [5/8] 0, 128
    %1136 = vxpose.xlu0.c.b16.cont [6/8] 0, 128
    %1137 = vxpose.xlu0.c.b16.cont [7/8] 0, 128
    %1138 = vxpose.xlu0.c.b16.end [8/8] 0, 128
    %v1139 = vpop.trf.xlu0
    %v1140 = vpop.trf.xlu0
    %v1141 = vpop.trf.xlu0
    %v1142 = vpop.trf.xlu0
    %v1143 = vpop.trf.xlu0
    %v1144 = vpop.trf.xlu0
    %v1145 = vpop.trf.xlu0
    %v1146 = vpop.trf.xlu0
    %v1148 = vsel %vm651, %v1139, 0
    %v1150 = vsel %vm658, %v434, 0
    %1152 = vmatprep.subr.bf16.mxu0 0
    %1153 = vmatpush1.bf16.msra.mxu0 %v1150
    %1154 = vmatprep.subr.bf16.mxu0 0
    %1155 = vmatpush1.bf16.msra.mxu0 0
    %1156 = vmatprep.subr.bf16.mxu0 0
    %1157 = vmatpush1.bf16.msra.mxu0 0
    %1158 = vmatprep.subr.bf16.mxu0 0
    %1159 = vmatpush1.bf16.msra.mxu0 0
    %1160 = vmatprep.subr.bf16.mxu0 0
    %1161 = vmatpush1.bf16.msra.mxu0 0
    %1162 = vmatprep.subr.bf16.mxu0 0
    %1163 = vmatpush1.bf16.msra.mxu0 0
    %1164 = vmatprep.subr.bf16.mxu0 0
    %1165 = vmatpush1.bf16.msra.mxu0 0
    %1166 = vmatprep.subr.bf16.mxu0 0
    %1167 = vmatpush1.bf16.msra.mxu0 0
    %1168 = vmatprep.subr.bf16.mxu0 0
    %1169 = vmatpush1.bf16.msra.mxu0 0
    %1170 = vmatprep.subr.bf16.mxu0 0
    %1171 = vmatpush1.bf16.msra.mxu0 0
    %1172 = vmatprep.subr.bf16.mxu0 0
    %1173 = vmatpush1.bf16.msra.mxu0 0
    %1174 = vmatprep.subr.bf16.mxu0 0
    %1175 = vmatpush1.bf16.msra.mxu0 0
    %1176 = vmatprep.subr.bf16.mxu0 0
    %1177 = vmatpush1.bf16.msra.mxu0 0
    %1178 = vmatprep.subr.bf16.mxu0 0
    %1179 = vmatpush1.bf16.msra.mxu0 0
    %1180 = vmatprep.subr.bf16.mxu0 0
    %1181 = vmatpush1.bf16.msra.mxu0 0
    %1182 = vmatprep.subr.bf16.mxu0 0
    %1183 = vmatpush1.bf16.msra.mxu0 0
    %1184 = vmatprep.mubr.bf16.mxu0 0
    %1185 = vmatmul.mubr.bf16.gmra.mrb[0].mxu0 %v1148
    %v1186 = vpop.f32.mrb[0].mxu0
    %v1187 = vadd.f32 %v1129, %v1186
    %v1188 = vpop.f32.mrb[0].mxu0
    %v1189 = vpop.f32.mrb[0].mxu0
    %v1190 = vadd.f32 %v1130, %v1189
    %v1191 = vpop.f32.mrb[0].mxu0
    %1192 = vdwg.mxu0
    %v1193 = vld [vmem:[%s18] sm:$0xff]
    %v1194 = vld [vmem:[%s18 + $0x8] sm:$0x3]
    %v1195 = vmul.f32 %v1193, 0.95
    %v1196 = vmul.f32 %v1194, 0.95
    %v1197 = vmul.f32 %v1187, 0.001
    %v1198 = vmul.f32 %v1190, 0.001
    %v1199 = vsub.f32 %v1195, %v1197
    %v1200 = vsub.f32 %v1196, %v1198
    %1201 = vst.msk [vmem:[%s18] sm:$0xff] %vm442, %v1199
    %vm1202 = vcmask 254976
    %1203 = vst.msk [vmem:[%s18 + $0x8] sm:$0x3] %vm1202, %v1200
    %v1204 = vadd.f32 %v1129, %v1199
    %v1205 = vadd.f32 %v1130, %v1200
    %1206 = vst.msk [vmem:[%s14] sm:$0xff] %vm442, %v1204
    %1207 = vst.msk [vmem:[%s14 + $0x8] sm:$0x3] %vm1202, %v1205
    %v1208 = vld [vmem:[%s15] sm:$0x1]
    %v1209 = vadd.f32 %v544, %v1208
    %v1210 = vld [vmem:[%s19] sm:$0x1]
    %v1211 = vmul.f32 %v1210, 0.95
    %v1212 = vmul.f32 %v1209, 0.001
    %v1213 = vsub.f32 %v1211, %v1212
    %vm1214 = vcmask 73728
    %1215 = vst.msk [vmem:[%s19] sm:$0x1] %vm1214, %v1213
    %v1216 = vadd.f32 %v1208, %v1213
    %1217 = vst.msk [vmem:[%s15] sm:$0x1] %vm1214, %v1216
    // Predicated region
    $region46: #{run.1} parent=1 // pred_check
      _
    $region47: #{run.1} parent=1 // pred_check_branch
      %1219 = sbr.rel (0) target = $region49
    $region48: #{run.1} parent=1 // pred_region
      %s1221 = ssub.s32 16, 16
      %1222 = vsyncadd [#allocation3], %s1221
      %s1224 = sshll.u32 [#allocation2], 4
      %s1225 = int_to_ptr.vmem [resolvable:$true] %s1224
      %1227 = dma.vmem_to_hbm [thread:$0]  %s1225, 16, %s10, [#allocation3]
    $region49: #{run.1} parent=1 // pred_fallthru
      _
    // Predicated region
    $region50: #{run.1} parent=1 // pred_check
      _
    $region51: #{run.1} parent=1 // pred_check_branch
      %1229 = sbr.rel (0) target = $region53
    $region52: #{run.1} parent=1 // pred_region
      _
    $region53: #{run.1} parent=1 // pred_fallthru
      _
    // Predicated region
    $region54: #{run.1} parent=1 // pred_check
      _
    $region55: #{run.1} parent=1 // pred_check_branch
      %1231 = sbr.rel (0) target = $region57
    $region56: #{run.1} parent=1 // pred_region
      _
    $region57: #{run.1} parent=1 // pred_fallthru
      _
    // Predicated region
    $region58: #{run.1} parent=1 // pred_check
      _
    $region59: #{run.1} parent=1 // pred_check_branch
      %1233 = sbr.rel (0) target = $region61
    $region60: #{run.1} parent=1 // pred_region
      _
    $region61: #{run.1} parent=1 // pred_fallthru
      _
    // Predicated region
    $region62: #{run.1} parent=1 // pred_check
      _
    $region63: #{run.1} parent=1 // pred_check_branch
      %1235 = sbr.rel (0) target = $region65
    $region64: #{run.1} parent=1 // pred_region
      _
    $region65: #{run.1} parent=1 // pred_fallthru
      _
    // Predicated region
    $region66: #{run.1} parent=1 // pred_check
      _
    $region67: #{run.1} parent=1 // pred_check_branch
      %1237 = sbr.rel (0) target = $region69
    $region68: #{run.1} parent=1 // pred_region
      _
    $region69: #{run.1} parent=1 // pred_fallthru
      _
    // Predicated region
    $region70: #{run.1} parent=1 // pred_check
      _
    $region71: #{run.1} parent=1 // pred_check_branch
      %1239 = sbr.rel (0) target = $region73
    $region72: #{run.1} parent=1 // pred_region
      _
    $region73: #{run.1} parent=1 // pred_fallthru
      _
    // Predicated region
    $region74: #{run.1} parent=1 // pred_check
      _
    $region75: #{run.1} parent=1 // pred_check_branch
      %1241 = sbr.rel (0) target = $region77
    $region76: #{run.1} parent=1 // pred_region
      _
    $region77: #{run.1} parent=1 // pred_fallthru
      _
    // Predicated region
    $region78: #{run.1} parent=1 // pred_check
      _
    $region79: #{run.1} parent=1 // pred_check_branch
      %1243 = sbr.rel (0) target = $region81
    $region80: #{run.1} parent=1 // pred_region
      _
    $region81: #{run.1} parent=1 // pred_fallthru
      _
    // Predicated region
    $region82: #{run.1} parent=1 // pred_check
      _
    $region83: #{run.1} parent=1 // pred_check_branch
      %1245 = sbr.rel (0) target = $region85
    $region84: #{run.1} parent=1 // pred_region
      _
    $region85: #{run.1} parent=1 // pred_fallthru
      _
    // Predicated region
    $region86: #{run.1} parent=1 // pred_check
      _
    $region87: #{run.1} parent=1 // pred_check_branch
      %1247 = sbr.rel (0) target = $region89
    $region88: #{run.1} parent=1 // pred_region
      %1248 = dma.done [#allocation3], 16
    $region89: #{run.1} parent=1 // pred_fallthru
      _
    // Predicated region
    $region90: #{run.1} parent=1 // pred_check
      _
    $region91: #{run.1} parent=1 // pred_check_branch
      %1250 = sbr.rel (0) target = $region93
    $region92: #{run.1} parent=1 // pred_region
      _
    $region93: #{run.1} parent=1 // pred_fallthru
      _
    // Predicated region
    $region94: #{run.1} parent=1 // pred_check
      _
    $region95: #{run.1} parent=1 // pred_check_branch
      %1252 = sbr.rel (0) target = $region97
    $region96: #{run.1} parent=1 // pred_region
      _
    $region97: #{run.1} parent=1 // pred_fallthru
      _
    // Predicated region
    $region98: #{run.1} parent=1 // pred_check
      _
    $region99: #{run.1} parent=1 // pred_check_branch
      %1254 = sbr.rel (0) target = $region101
    $region100: #{run.1} parent=1 // pred_region
      _
    $region101: #{run.1} parent=1 // pred_fallthru
      _
    // Predicated region
    $region102: #{run.1} parent=1 // pred_check
      _
    $region103: #{run.1} parent=1 // pred_check_branch
      %1256 = sbr.rel (0) target = $region105
    $region104: #{run.1} parent=1 // pred_region
      _
    $region105: #{run.1} parent=1 // pred_fallthru
      _
    // Predicated region
    $region106: #{run.1} parent=1 // pred_check
      _
    $region107: #{run.1} parent=1 // pred_check_branch
      %1258 = sbr.rel (0) target = $region109
    $region108: #{run.1} parent=1 // pred_region
      _
    $region109: #{run.1} parent=1 // pred_fallthru
      _
    // Predicated region
    $region110: #{run.1} parent=1 // pred_check
      _
    $region111: #{run.1} parent=1 // pred_check_branch
      %1260 = sbr.rel (0) target = $region113
    $region112: #{run.1} parent=1 // pred_region
      _
    $region113: #{run.1} parent=1 // pred_fallthru
      _
    // Predicated region
    $region114: #{run.1} parent=1 // pred_check
      _
    $region115: #{run.1} parent=1 // pred_check_branch
      %1262 = sbr.rel (0) target = $region117
    $region116: #{run.1} parent=1 // pred_region
      _
    $region117: #{run.1} parent=1 // pred_fallthru
      _
    // Predicated region
    $region118: #{run.1} parent=1 // pred_check
      _
    $region119: #{run.1} parent=1 // pred_check_branch
      %1264 = sbr.rel (0) target = $region121
    $region120: #{run.1} parent=1 // pred_region
      _
    $region121: #{run.1} parent=1 // pred_fallthru
      _
    // Predicated region
    $region122: #{run.1} parent=1 // pred_check
      _
    $region123: #{run.1} parent=1 // pred_check_branch
      %1266 = sbr.rel (0) target = $region125
    $region124: #{run.1} parent=1 // pred_region
      _
    $region125: #{run.1} parent=1 // pred_fallthru
      _
    %1267 = vsyncpa [#allocation3], 1

</llo_original>
